<compile_context>
chip_gen: v7x
topology: tpu7x:2x2x1
jax: 0.10.0
libtpu: 0.0.40
codegen_flags: <defaults>
</compile_context>

<pallas_src>
import functools

import jax
import jax.numpy as jnp
from jax.experimental import pallas as pl
from jax.experimental.pallas import tpu as pltpu


# ----------------------------------------------------------------------------
# Tiling helpers
# ----------------------------------------------------------------------------
def _round_up(x, m):
    return (x + m - 1) // m * m


def _chip_config():
    """Generation-aware VMEM budget / minimum grid steps / vmem_limit cap."""
    kind = ""
    try:
        kind = jax.devices()[0].device_kind.lower()
    except Exception:
        pass
    if "v5" in kind:   # v5e: 128 MiB VMEM (16 MiB default scoped), single vst slot
        return dict(budget_bytes=24 << 20, vmem_limit_cap=48 << 20, min_steps=2)
    if "v6" in kind:   # v6e: 128 MiB VMEM -> large tiles amortize per-step overhead
        return dict(budget_bytes=48 << 20, vmem_limit_cap=64 << 20, min_steps=2)
    if "7" in kind:    # v7x: 64 MiB VMEM per TC, 2 TCs -> >=4 steps, <=32 MiB scoped
        return dict(budget_bytes=24 << 20, vmem_limit_cap=32 << 20, min_steps=4)
    return dict(budget_bytes=16 << 20, vmem_limit_cap=32 << 20, min_steps=2)


def _choose_tiling(mtot, b, cin, cout, *, in_bytes=4, lane_chunk=256, config=None):
    """Pick padded mode length, a 128-multiple mode tile, and a consistent VMEM limit.

    Budgets BOTH the double-buffered I/O blocks and the fixed in-kernel working set
    (accumulators + broadcast temporaries), and minimizes tail padding beyond the
    unavoidable round-up of mtot to 128 lanes.
    """
    cfg = config or _chip_config()
    budget = cfg["budget_bytes"]
    min_steps = cfg["min_steps"]
    cap = cfg["vmem_limit_cap"]

    m128 = _round_up(max(mtot, 1), 128)

    # Bytes per mode lane: real+imag (x2) of activation/weight/output blocks,
    # each double-buffered (x2) by the BlockSpec pipeline.  Outputs stay f32.
    per_lane = 2 * 2 * ((b * cin + cin * cout) * in_bytes + b * cout * 4)
    # Fixed in-kernel working set (independent of mt thanks to the lane-chunk loop):
    # 2 f32 accumulators + ~8 broadcast/product temporaries of (cout, lane_chunk).
    fixed = 10 * cout * lane_chunk * 4

    avail = max(budget - fixed, 128 * per_lane)
    mt_cap = max(128, (avail // per_lane) // 128 * 128)
    # Keep >= min_steps grid steps when possible so the "parallel" axis feeds both
    # v7x TensorCores with pipelining headroom.
    if m128 >= min_steps * 128:
        mt_cap = min(mt_cap, max(128, (m128 // min_steps) // 128 * 128))
    mt_cap = min(mt_cap, m128)

    # Among 128-multiples <= mt_cap, minimize tail padding; prefer larger tiles on ties.
    best_key, mt, mpad = None, 128, m128
    for cand in range(128, mt_cap + 1, 128):
        cand_pad = _round_up(m128, cand)
        key = (cand_pad - m128, -cand)
        if best_key is None or key < best_key:
            best_key, mt, mpad = key, cand, cand_pad

    vmem_need = per_lane * mt + fixed
    vmem_limit = int(min(cap, max(vmem_need + (4 << 20), 16 << 20)))
    return mpad, mt, vmem_limit


# ----------------------------------------------------------------------------
# Pallas kernel: complex multiply, reduced over Cin, for one mode tile.
#   ar/ai : (B*Cin,    MT)   real / imag of the folded x_ft corners
#   wr/wi : (Cin*Cout, MT)   real / imag of the folded weights
#   or/oi : (B*Cout,   MT)   out[b,o,m] = sum_i a[b,i,m] * w[i,o,m]   (complex)
#
# All refs are indexed with static 2-D row-block slices (zero-cost views); an inner
# lane-chunk loop keeps the (Cout, lane_chunk) f32 accumulators vreg-resident and
# finishes the Cin reduction before a single store per output block.
# Kept on the VPU on purpose: the weight varies per mode lane, so this is inherently
# per-lane elementwise work -- the MXU would run at <5% utilization here.
# ----------------------------------------------------------------------------
def _make_spectral_kernel(B, Cin, Cout, lane_chunk):
    def kernel(ar_ref, ai_ref, wr_ref, wi_ref, or_ref, oi_ref):
        mt = ar_ref.shape[-1]
        assert mt % lane_chunk == 0
        # All loop bounds are compile-time constants, so these Python loops are
        # static unrolls (equivalent to lax.fori_loop(..., unroll=True)).
        for lo in range(0, mt, lane_chunk):
            hi = lo + lane_chunk
            for b in range(B):
                acc_r = jnp.zeros((Cout, lane_chunk), jnp.float32)
                acc_i = jnp.zeros((Cout, lane_chunk), jnp.float32)
                for i in range(Cin):
                    row = b * Cin + i
                    # Upcast each operand to f32 BEFORE the MACs so the real-part
                    # cancellation never happens in bf16 (no-op for f32 inputs).
                    a_r = ar_ref[row:row + 1, lo:hi].astype(jnp.float32)   # (1, LC)
                    a_i = ai_ref[row:row + 1, lo:hi].astype(jnp.float32)
                    w_r = wr_ref[i * Cout:(i + 1) * Cout, lo:hi].astype(jnp.float32)
                    w_i = wi_ref[i * Cout:(i + 1) * Cout, lo:hi].astype(jnp.float32)
                    acc_r = acc_r + (a_r * w_r - a_i * w_i)
                    acc_i = acc_i + (a_i * w_r + a_r * w_i)
                # Exactly one store per output element.
                or_ref[b * Cout:(b + 1) * Cout, lo:hi] = acc_r.astype(or_ref.dtype)
                oi_ref[b * Cout:(b + 1) * Cout, lo:hi] = acc_i.astype(oi_ref.dtype)

    return kernel


def spectral_mul_pallas(ar2, ai2, wr2, wi2, *, B, Cin, Cout, mt, vmem_limit_bytes):
    """ar2/ai2: (B*Cin, Mpad); wr2/wi2: (Cin*Cout, Mpad) -> (B*Cout, Mpad) real & imag."""
    mpad = ar2.shape[-1]
    assert mpad % mt == 0
    grid = (mpad // mt,)
    lane_chunk = 256 if mt % 256 == 0 else 128

    a_spec = pl.BlockSpec((B * Cin, mt), lambda j: (0, j))
    w_spec = pl.BlockSpec((Cin * Cout, mt), lambda j: (0, j))
    o_spec = pl.BlockSpec((B * Cout, mt), lambda j: (0, j))

    return pl.pallas_call(
        _make_spectral_kernel(B, Cin, Cout, lane_chunk),
        out_shape=(
            jax.ShapeDtypeStruct((B * Cout, mpad), jnp.float32),
            jax.ShapeDtypeStruct((B * Cout, mpad), jnp.float32),
        ),
        grid=grid,
        in_specs=[a_spec, a_spec, w_spec, w_spec],
        out_specs=(o_spec, o_spec),
        compiler_params=pltpu.CompilerParams(
            dimension_semantics=("parallel",),
            vmem_limit_bytes=vmem_limit_bytes,
        ),
    )(ar2, ai2, wr2, wi2)


# ----------------------------------------------------------------------------
# Weight preprocessing (call ONCE at parameter setup, not per forward pass).
# ----------------------------------------------------------------------------
def prepare_spectral_weights(w1, w2, w3, w4, mpad, storage_dtype=jnp.float32):
    Cin, Cout, m1, m2, m3, _ = w1.shape
    mtot = 4 * m1 * m2 * m3
    w = jnp.stack([w1, w2, w3, w4], axis=2)            # (Cin, Cout, 4, m1, m2, m3, 2)
    wr = w[..., 0].reshape(Cin * Cout, mtot)
    wi = w[..., 1].reshape(Cin * Cout, mtot)
    pad = ((0, 0), (0, mpad - mtot))
    return (jnp.pad(wr, pad).astype(storage_dtype),
            jnp.pad(wi, pad).astype(storage_dtype))


# ----------------------------------------------------------------------------
# out_ft assembly: zero-pad + concat (no 4-step scatter chain) when corners
# don't overlap; otherwise fall back to sequential updates (torch semantics).
# ----------------------------------------------------------------------------
def _assemble_out_ft(o, X, Y, Zr, m1, m2, m3):
    B, Cout = o.shape[0], o.shape[1]
    cz = jnp.complex64
    if 2 * m1 <= X and 2 * m2 <= Y and m3 <= Zr:
        z_y = jnp.zeros((B, Cout, m1, Y - 2 * m2, m3), cz)
        top = jnp.concatenate([o[:, :, 0], z_y, o[:, :, 2]], axis=3)   # x rows [:m1]
        bot = jnp.concatenate([o[:, :, 1], z_y, o[:, :, 3]], axis=3)   # x rows [X-m1:]
        z_x = jnp.zeros((B, Cout, X - 2 * m1, Y, m3), cz)
        blk = jnp.concatenate([top, z_x, bot], axis=2)                 # (B,Cout,X,Y,m3)
        z_z = jnp.zeros((B, Cout, X, Y, Zr - m3), cz)
        return jnp.concatenate([blk, z_z], axis=4)
    out_ft = jnp.zeros((B, Cout, X, Y, Zr), cz)
    out_ft = out_ft.at[:, :, :m1, :m2, :m3].set(o[:, :, 0])
    out_ft = out_ft.at[:, :, X - m1:, :m2, :m3].set(o[:, :, 1])
    out_ft = out_ft.at[:, :, :m1, Y - m2:, :m3].set(o[:, :, 2])
    out_ft = out_ft.at[:, :, X - m1:, Y - m2:, :m3].set(o[:, :, 3])
    return out_ft


# ----------------------------------------------------------------------------
# Forward pass with pre-prepared (flattened, padded) weights -- the fast path.
# ----------------------------------------------------------------------------
def spectral_conv3d_fast_prepared(x, wr2, wi2, *, modes1, modes2, modes3,
                                  mpad, mt, out_channels, vmem_limit_bytes):
    B, Cin, X, Y, Z = x.shape
    Cout = out_channels
    m1, m2, m3 = modes1, modes2, modes3
    mtot = 4 * m1 * m2 * m3
    Zr = Z // 2 + 1
    storage_dtype = wr2.dtype

    # TODO(synk): FFTs have no Pallas equivalent on TPU; XLA's rfftn/irfftn is used.
    # torch.rfft(x, 3, normalized=True, onesided=True) == rfftn(..., norm="ortho").
    x_ft = jnp.fft.rfftn(x, axes=(-3, -2, -1), norm="ortho")   # (B,Cin,X,Y,Zr) c64

    # Fold the 4 corners into one flattened mode axis, corner-major: (B, Cin, 4*M).
    # (If the end-to-end profile shows this wrapper hot, fuse corner stack + real/imag
    # split + pad into one op and have the kernel write a (2, B*Cout, mpad) slab.)
    corners = jnp.stack([
        x_ft[:, :, :m1, :m2, :m3],
        x_ft[:, :, X - m1:, :m2, :m3],
        x_ft[:, :, :m1, Y - m2:, :m3],
        x_ft[:, :, X - m1:, Y - m2:, :m3],
    ], axis=2)                                                  # (B, Cin, 4, m1, m2, m3)
    a = corners.reshape(B * Cin, mtot)
    pad = ((0, 0), (0, mpad - mtot))
    ar = jnp.pad(jnp.real(a).astype(storage_dtype), pad)        # padded lanes are zero
    ai = jnp.pad(jnp.imag(a).astype(storage_dtype), pad)

    or2, oi2 = spectral_mul_pallas(ar, ai, wr2, wi2, B=B, Cin=Cin, Cout=Cout,
                                   mt=mt, vmem_limit_bytes=vmem_limit_bytes)

    # Drop zero-padded lanes, recover (B, Cout, 4, m1, m2, m3) complex corners.
    o = (or2[:, :mtot] + 1j * oi2[:, :mtot]).astype(jnp.complex64)
    o = o.reshape(B, Cout, 4, m1, m2, m3)

    # Note: the original module allocates out_ft with in_channels; the assignments
    # only type-check when in_channels == out_channels, which is assumed here.
    out_ft = _assemble_out_ft(o, X, Y, Zr, m1, m2, m3)
    x_out = jnp.fft.irfftn(out_ft, s=(X, Y, Z), axes=(-3, -2, -1), norm="ortho")
    return x_out.astype(x.dtype)


# Module-parity convenience entry point (prepares weights on every call).
def spectral_conv3d_fast(x, w1, w2, w3, w4, *, modes1, modes2, modes3,
                         storage_dtype=jnp.float32):
    B, Cin = x.shape[0], x.shape[1]
    Cout = w1.shape[1]
    mtot = 4 * modes1 * modes2 * modes3
    in_bytes = jnp.dtype(storage_dtype).itemsize
    mpad, mt, vmem_limit = _choose_tiling(mtot, B, Cin, Cout, in_bytes=in_bytes)
    wr2, wi2 = prepare_spectral_weights(w1, w2, w3, w4, mpad, storage_dtype)
    return spectral_conv3d_fast_prepared(
        x, wr2, wi2, modes1=modes1, modes2=modes2, modes3=modes3,
        mpad=mpad, mt=mt, out_channels=Cout, vmem_limit_bytes=vmem_limit)


# ----------------------------------------------------------------------------
# Pure-JAX reference (mirrors compl_mul3d / forward) for correctness checking.
# ----------------------------------------------------------------------------
def _reference_forward(x, w1, w2, w3, w4, m1, m2, m3):
    B, Cin, X, Y, Z = x.shape
    Cout = w1.shape[1]
    Zr = Z // 2 + 1
    x_ft = jnp.fft.rfftn(x, axes=(-3, -2, -1), norm="ortho")

    def cmul(a, w):  # a: (B,Cin,m1,m2,m3) c64, w: (Cin,Cout,m1,m2,m3,2)
        wc = (w[..., 0] + 1j * w[..., 1]).astype(jnp.complex64)
        return jnp.einsum("bixyz,ioxyz->boxyz", a, wc)

    out_ft = jnp.zeros((B, Cout, X, Y, Zr), dtype=jnp.complex64)
    out_ft = out_ft.at[:, :, :m1, :m2, :m3].set(cmul(x_ft[:, :, :m1, :m2, :m3], w1))
    out_ft = out_ft.at[:, :, X - m1:, :m2, :m3].set(cmul(x_ft[:, :, X - m1:, :m2, :m3], w2))
    out_ft = out_ft.at[:, :, :m1, Y - m2:, :m3].set(cmul(x_ft[:, :, :m1, Y - m2:, :m3], w3))
    out_ft = out_ft.at[:, :, X - m1:, Y - m2:, :m3].set(
        cmul(x_ft[:, :, X - m1:, Y - m2:, :m3], w4))
    return jnp.fft.irfftn(out_ft, s=(X, Y, Z), axes=(-3, -2, -1), norm="ortho")


if __name__ == "__main__":
    # Small, module-consistent shapes.
    B, Cin, Cout = 2, 4, 4
    X, Y, Z = 16, 16, 16
    m1, m2, m3 = 4, 4, 3           # modes3 <= Z//2 + 1

    key = jax.random.PRNGKey(0)
    kx, k1, k2, k3, k4 = jax.random.split(key, 5)
    scale = 1.0 / (Cin * Cout)
    wshape = (Cin, Cout, m1, m2, m3, 2)

    x = jax.random.normal(kx, (B, Cin, X, Y, Z), dtype=jnp.float32)
    w1 = scale * jax.random.uniform(k1, wshape, dtype=jnp.float32)
    w2 = scale * jax.random.uniform(k2, wshape, dtype=jnp.float32)
    w3 = scale * jax.random.uniform(k3, wshape, dtype=jnp.float32)
    w4 = scale * jax.random.uniform(k4, wshape, dtype=jnp.float32)

    ref = _reference_forward(x, w1, w2, w3, w4, m1, m2, m3)
    mtot = 4 * m1 * m2 * m3

    # ---- f32 storage path (exact parity with the module) ----
    mpad, mt, vmem_limit = _choose_tiling(mtot, B, Cin, Cout, in_bytes=4)
    wr2, wi2 = prepare_spectral_weights(w1, w2, w3, w4, mpad, jnp.float32)
    fwd = jax.jit(functools.partial(
        spectral_conv3d_fast_prepared,
        modes1=m1, modes2=m2, modes3=m3,
        mpad=mpad, mt=mt, out_channels=Cout, vmem_limit_bytes=vmem_limit))
    out = fwd(x, wr2, wi2)
    jax.block_until_ready(out)
    assert out.shape == (B, Cout, X, Y, Z)
    assert jnp.allclose(out, ref, atol=1e-5, rtol=1e-4)

    # ---- bf16 storage path (halves HBM traffic; f32 accumulation in-kernel) ----
    mpad_b, mt_b, vmem_limit_b = _choose_tiling(mtot, B, Cin, Cout, in_bytes=2)
    wr2_b, wi2_b = prepare_spectral_weights(w1, w2, w3, w4, mpad_b, jnp.bfloat16)
    fwd_b = jax.jit(functools.partial(
        spectral_conv3d_fast_prepared,
        modes1=m1, modes2=m2, modes3=m3,
        mpad=mpad_b, mt=mt_b, out_channels=Cout, vmem_limit_bytes=vmem_limit_b))
    out_b = fwd_b(x, wr2_b, wi2_b)
    jax.block_until_ready(out_b)
    assert out_b.shape == (B, Cout, X, Y, Z)
    assert jnp.allclose(out_b, ref, atol=2e-3, rtol=5e-2)

    print("KERNEL_OK")
</pallas_src>

<mosaic_0001>
module attributes {stable_mosaic.version = 11 : i64} {
  func.func @kernel(%arg0: i32, %arg1: memref<8x128xf32, #tpu.memory_space<vmem>>, %arg2: memref<8x128xf32, #tpu.memory_space<vmem>>, %arg3: memref<16x128xf32, #tpu.memory_space<vmem>>, %arg4: memref<16x128xf32, #tpu.memory_space<vmem>>, %arg5: memref<8x128xf32, #tpu.memory_space<vmem>>, %arg6: memref<8x128xf32, #tpu.memory_space<vmem>>) attributes {dimension_semantics = [#tpu.dimension_semantics<parallel>], iteration_bounds = array<i64: 2>, scalar_prefetch = 0 : i64, scratch_operands = 0 : i64, tpu.core_type = #tpu.core_type<tc>, window_params = [{transform_indices = @transform_0, window_bounds = array<i64: 8, 128>}, {transform_indices = @transform_1, window_bounds = array<i64: 8, 128>}, {transform_indices = @transform_2, window_bounds = array<i64: 16, 128>}, {transform_indices = @transform_3, window_bounds = array<i64: 16, 128>}, {transform_indices = @transform_4, window_bounds = array<i64: 8, 128>}, {transform_indices = @transform_5, window_bounds = array<i64: 8, 128>}]} {
    %cst = arith.constant 0.000000e+00 : f32
    %0 = vector.broadcast %cst : f32 to vector<4x128xf32>
    %cst_0 = arith.constant 0.000000e+00 : f32
    %1 = vector.broadcast %cst_0 : f32 to vector<4x128xf32>
    %c0 = arith.constant 0 : index
    %c0_1 = arith.constant 0 : index
    %2 = vector.load %arg1[%c0, %c0_1] : memref<8x128xf32, #tpu.memory_space<vmem>>, vector<1x128xf32>
    %c0_2 = arith.constant 0 : index
    %c0_3 = arith.constant 0 : index
    %3 = vector.load %arg2[%c0_2, %c0_3] : memref<8x128xf32, #tpu.memory_space<vmem>>, vector<1x128xf32>
    %c0_4 = arith.constant 0 : index
    %c0_5 = arith.constant 0 : index
    %4 = vector.load %arg3[%c0_4, %c0_5] : memref<16x128xf32, #tpu.memory_space<vmem>>, vector<4x128xf32>
    %c0_6 = arith.constant 0 : index
    %c0_7 = arith.constant 0 : index
    %5 = vector.load %arg4[%c0_6, %c0_7] : memref<16x128xf32, #tpu.memory_space<vmem>>, vector<4x128xf32>
    %6 = vector.broadcast %2 : vector<1x128xf32> to vector<4x128xf32>
    %7 = arith.mulf %6, %4 : vector<4x128xf32>
    %8 = vector.broadcast %3 : vector<1x128xf32> to vector<4x128xf32>
    %9 = arith.mulf %8, %5 : vector<4x128xf32>
    %10 = arith.subf %7, %9 : vector<4x128xf32>
    %11 = arith.addf %0, %10 : vector<4x128xf32>
    %12 = vector.broadcast %3 : vector<1x128xf32> to vector<4x128xf32>
    %13 = arith.mulf %12, %4 : vector<4x128xf32>
    %14 = vector.broadcast %2 : vector<1x128xf32> to vector<4x128xf32>
    %15 = arith.mulf %14, %5 : vector<4x128xf32>
    %16 = arith.addf %13, %15 : vector<4x128xf32>
    %17 = arith.addf %1, %16 : vector<4x128xf32>
    %c1 = arith.constant 1 : index
    %c0_8 = arith.constant 0 : index
    %18 = vector.load %arg1[%c1, %c0_8] : memref<8x128xf32, #tpu.memory_space<vmem>>, vector<1x128xf32>
    %c1_9 = arith.constant 1 : index
    %c0_10 = arith.constant 0 : index
    %19 = vector.load %arg2[%c1_9, %c0_10] : memref<8x128xf32, #tpu.memory_space<vmem>>, vector<1x128xf32>
    %c4 = arith.constant 4 : index
    %c0_11 = arith.constant 0 : index
    %20 = vector.load %arg3[%c4, %c0_11] : memref<16x128xf32, #tpu.memory_space<vmem>>, vector<4x128xf32>
    %c4_12 = arith.constant 4 : index
    %c0_13 = arith.constant 0 : index
    %21 = vector.load %arg4[%c4_12, %c0_13] : memref<16x128xf32, #tpu.memory_space<vmem>>, vector<4x128xf32>
    %22 = vector.broadcast %18 : vector<1x128xf32> to vector<4x128xf32>
    %23 = arith.mulf %22, %20 : vector<4x128xf32>
    %24 = vector.broadcast %19 : vector<1x128xf32> to vector<4x128xf32>
    %25 = arith.mulf %24, %21 : vector<4x128xf32>
    %26 = arith.subf %23, %25 : vector<4x128xf32>
    %27 = arith.addf %11, %26 : vector<4x128xf32>
    %28 = vector.broadcast %19 : vector<1x128xf32> to vector<4x128xf32>
    %29 = arith.mulf %28, %20 : vector<4x128xf32>
    %30 = vector.broadcast %18 : vector<1x128xf32> to vector<4x128xf32>
    %31 = arith.mulf %30, %21 : vector<4x128xf32>
    %32 = arith.addf %29, %31 : vector<4x128xf32>
    %33 = arith.addf %17, %32 : vector<4x128xf32>
    %c2 = arith.constant 2 : index
    %c0_14 = arith.constant 0 : index
    %34 = vector.load %arg1[%c2, %c0_14] : memref<8x128xf32, #tpu.memory_space<vmem>>, vector<1x128xf32>
    %c2_15 = arith.constant 2 : index
    %c0_16 = arith.constant 0 : index
    %35 = vector.load %arg2[%c2_15, %c0_16] : memref<8x128xf32, #tpu.memory_space<vmem>>, vector<1x128xf32>
    %c8 = arith.constant 8 : index
    %c0_17 = arith.constant 0 : index
    %36 = vector.load %arg3[%c8, %c0_17] : memref<16x128xf32, #tpu.memory_space<vmem>>, vector<4x128xf32>
    %c8_18 = arith.constant 8 : index
    %c0_19 = arith.constant 0 : index
    %37 = vector.load %arg4[%c8_18, %c0_19] : memref<16x128xf32, #tpu.memory_space<vmem>>, vector<4x128xf32>
    %38 = vector.broadcast %34 : vector<1x128xf32> to vector<4x128xf32>
    %39 = arith.mulf %38, %36 : vector<4x128xf32>
    %40 = vector.broadcast %35 : vector<1x128xf32> to vector<4x128xf32>
    %41 = arith.mulf %40, %37 : vector<4x128xf32>
    %42 = arith.subf %39, %41 : vector<4x128xf32>
    %43 = arith.addf %27, %42 : vector<4x128xf32>
    %44 = vector.broadcast %35 : vector<1x128xf32> to vector<4x128xf32>
    %45 = arith.mulf %44, %36 : vector<4x128xf32>
    %46 = vector.broadcast %34 : vector<1x128xf32> to vector<4x128xf32>
    %47 = arith.mulf %46, %37 : vector<4x128xf32>
    %48 = arith.addf %45, %47 : vector<4x128xf32>
    %49 = arith.addf %33, %48 : vector<4x128xf32>
    %c3 = arith.constant 3 : index
    %c0_20 = arith.constant 0 : index
    %50 = vector.load %arg1[%c3, %c0_20] : memref<8x128xf32, #tpu.memory_space<vmem>>, vector<1x128xf32>
    %c3_21 = arith.constant 3 : index
    %c0_22 = arith.constant 0 : index
    %51 = vector.load %arg2[%c3_21, %c0_22] : memref<8x128xf32, #tpu.memory_space<vmem>>, vector<1x128xf32>
    %c12 = arith.constant 12 : index
    %c0_23 = arith.constant 0 : index
    %52 = vector.load %arg3[%c12, %c0_23] : memref<16x128xf32, #tpu.memory_space<vmem>>, vector<4x128xf32>
    %c12_24 = arith.constant 12 : index
    %c0_25 = arith.constant 0 : index
    %53 = vector.load %arg4[%c12_24, %c0_25] : memref<16x128xf32, #tpu.memory_space<vmem>>, vector<4x128xf32>
    %54 = vector.broadcast %50 : vector<1x128xf32> to vector<4x128xf32>
    %55 = arith.mulf %54, %52 : vector<4x128xf32>
    %56 = vector.broadcast %51 : vector<1x128xf32> to vector<4x128xf32>
    %57 = arith.mulf %56, %53 : vector<4x128xf32>
    %58 = arith.subf %55, %57 : vector<4x128xf32>
    %59 = arith.addf %43, %58 : vector<4x128xf32>
    %60 = vector.broadcast %51 : vector<1x128xf32> to vector<4x128xf32>
    %61 = arith.mulf %60, %52 : vector<4x128xf32>
    %62 = vector.broadcast %50 : vector<1x128xf32> to vector<4x128xf32>
    %63 = arith.mulf %62, %53 : vector<4x128xf32>
    %64 = arith.addf %61, %63 : vector<4x128xf32>
    %65 = arith.addf %49, %64 : vector<4x128xf32>
    %c0_26 = arith.constant 0 : index
    %c0_27 = arith.constant 0 : index
    %66 = vector.load %arg5[%c0_26, %c0_27] : memref<8x128xf32, #tpu.memory_space<vmem>>, vector<4x128xf32>
    tpu.vector_store %arg5[%c0_26, %c0_27], %59 {strides = array<i32>} : memref<8x128xf32, #tpu.memory_space<vmem>>, vector<4x128xf32>,
    %c0_28 = arith.constant 0 : index
    %c0_29 = arith.constant 0 : index
    %67 = vector.load %arg6[%c0_28, %c0_29] : memref<8x128xf32, #tpu.memory_space<vmem>>, vector<4x128xf32>
    tpu.vector_store %arg6[%c0_28, %c0_29], %65 {strides = array<i32>} : memref<8x128xf32, #tpu.memory_space<vmem>>, vector<4x128xf32>,
    %cst_30 = arith.constant 0.000000e+00 : f32
    %68 = vector.broadcast %cst_30 : f32 to vector<4x128xf32>
    %cst_31 = arith.constant 0.000000e+00 : f32
    %69 = vector.broadcast %cst_31 : f32 to vector<4x128xf32>
    %c4_32 = arith.constant 4 : index
    %c0_33 = arith.constant 0 : index
    %70 = vector.load %arg1[%c4_32, %c0_33] : memref<8x128xf32, #tpu.memory_space<vmem>>, vector<1x128xf32>
    %c4_34 = arith.constant 4 : index
    %c0_35 = arith.constant 0 : index
    %71 = vector.load %arg2[%c4_34, %c0_35] : memref<8x128xf32, #tpu.memory_space<vmem>>, vector<1x128xf32>
    %c0_36 = arith.constant 0 : index
    %c0_37 = arith.constant 0 : index
    %72 = vector.load %arg3[%c0_36, %c0_37] : memref<16x128xf32, #tpu.memory_space<vmem>>, vector<4x128xf32>
    %c0_38 = arith.constant 0 : index
    %c0_39 = arith.constant 0 : index
    %73 = vector.load %arg4[%c0_38, %c0_39] : memref<16x128xf32, #tpu.memory_space<vmem>>, vector<4x128xf32>
    %74 = vector.broadcast %70 : vector<1x128xf32> to vector<4x128xf32>
    %75 = arith.mulf %74, %72 : vector<4x128xf32>
    %76 = vector.broadcast %71 : vector<1x128xf32> to vector<4x128xf32>
    %77 = arith.mulf %76, %73 : vector<4x128xf32>
    %78 = arith.subf %75, %77 : vector<4x128xf32>
    %79 = arith.addf %68, %78 : vector<4x128xf32>
    %80 = vector.broadcast %71 : vector<1x128xf32> to vector<4x128xf32>
    %81 = arith.mulf %80, %72 : vector<4x128xf32>
    %82 = vector.broadcast %70 : vector<1x128xf32> to vector<4x128xf32>
    %83 = arith.mulf %82, %73 : vector<4x128xf32>
    %84 = arith.addf %81, %83 : vector<4x128xf32>
    %85 = arith.addf %69, %84 : vector<4x128xf32>
    %c5 = arith.constant 5 : index
    %c0_40 = arith.constant 0 : index
    %86 = vector.load %arg1[%c5, %c0_40] : memref<8x128xf32, #tpu.memory_space<vmem>>, vector<1x128xf32>
    %c5_41 = arith.constant 5 : index
    %c0_42 = arith.constant 0 : index
    %87 = vector.load %arg2[%c5_41, %c0_42] : memref<8x128xf32, #tpu.memory_space<vmem>>, vector<1x128xf32>
    %c4_43 = arith.constant 4 : index
    %c0_44 = arith.constant 0 : index
    %88 = vector.load %arg3[%c4_43, %c0_44] : memref<16x128xf32, #tpu.memory_space<vmem>>, vector<4x128xf32>
    %c4_45 = arith.constant 4 : index
    %c0_46 = arith.constant 0 : index
    %89 = vector.load %arg4[%c4_45, %c0_46] : memref<16x128xf32, #tpu.memory_space<vmem>>, vector<4x128xf32>
    %90 = vector.broadcast %86 : vector<1x128xf32> to vector<4x128xf32>
    %91 = arith.mulf %90, %88 : vector<4x128xf32>
    %92 = vector.broadcast %87 : vector<1x128xf32> to vector<4x128xf32>
    %93 = arith.mulf %92, %89 : vector<4x128xf32>
    %94 = arith.subf %91, %93 : vector<4x128xf32>
    %95 = arith.addf %79, %94 : vector<4x128xf32>
    %96 = vector.broadcast %87 : vector<1x128xf32> to vector<4x128xf32>
    %97 = arith.mulf %96, %88 : vector<4x128xf32>
    %98 = vector.broadcast %86 : vector<1x128xf32> to vector<4x128xf32>
    %99 = arith.mulf %98, %89 : vector<4x128xf32>
    %100 = arith.addf %97, %99 : vector<4x128xf32>
    %101 = arith.addf %85, %100 : vector<4x128xf32>
    %c6 = arith.constant 6 : index
    %c0_47 = arith.constant 0 : index
    %102 = vector.load %arg1[%c6, %c0_47] : memref<8x128xf32, #tpu.memory_space<vmem>>, vector<1x128xf32>
    %c6_48 = arith.constant 6 : index
    %c0_49 = arith.constant 0 : index
    %103 = vector.load %arg2[%c6_48, %c0_49] : memref<8x128xf32, #tpu.memory_space<vmem>>, vector<1x128xf32>
    %c8_50 = arith.constant 8 : index
    %c0_51 = arith.constant 0 : index
    %104 = vector.load %arg3[%c8_50, %c0_51] : memref<16x128xf32, #tpu.memory_space<vmem>>, vector<4x128xf32>
    %c8_52 = arith.constant 8 : index
    %c0_53 = arith.constant 0 : index
    %105 = vector.load %arg4[%c8_52, %c0_53] : memref<16x128xf32, #tpu.memory_space<vmem>>, vector<4x128xf32>
    %106 = vector.broadcast %102 : vector<1x128xf32> to vector<4x128xf32>
    %107 = arith.mulf %106, %104 : vector<4x128xf32>
    %108 = vector.broadcast %103 : vector<1x128xf32> to vector<4x128xf32>
    %109 = arith.mulf %108, %105 : vector<4x128xf32>
    %110 = arith.subf %107, %109 : vector<4x128xf32>
    %111 = arith.addf %95, %110 : vector<4x128xf32>
    %112 = vector.broadcast %103 : vector<1x128xf32> to vector<4x128xf32>
    %113 = arith.mulf %112, %104 : vector<4x128xf32>
    %114 = vector.broadcast %102 : vector<1x128xf32> to vector<4x128xf32>
    %115 = arith.mulf %114, %105 : vector<4x128xf32>
    %116 = arith.addf %113, %115 : vector<4x128xf32>
    %117 = arith.addf %101, %116 : vector<4x128xf32>
    %c7 = arith.constant 7 : index
    %c0_54 = arith.constant 0 : index
    %118 = vector.load %arg1[%c7, %c0_54] : memref<8x128xf32, #tpu.memory_space<vmem>>, vector<1x128xf32>
    %c7_55 = arith.constant 7 : index
    %c0_56 = arith.constant 0 : index
    %119 = vector.load %arg2[%c7_55, %c0_56] : memref<8x128xf32, #tpu.memory_space<vmem>>, vector<1x128xf32>
    %c12_57 = arith.constant 12 : index
    %c0_58 = arith.constant 0 : index
    %120 = vector.load %arg3[%c12_57, %c0_58] : memref<16x128xf32, #tpu.memory_space<vmem>>, vector<4x128xf32>
    %c12_59 = arith.constant 12 : index
    %c0_60 = arith.constant 0 : index
    %121 = vector.load %arg4[%c12_59, %c0_60] : memref<16x128xf32, #tpu.memory_space<vmem>>, vector<4x128xf32>
    %122 = vector.broadcast %118 : vector<1x128xf32> to vector<4x128xf32>
    %123 = arith.mulf %122, %120 : vector<4x128xf32>
    %124 = vector.broadcast %119 : vector<1x128xf32> to vector<4x128xf32>
    %125 = arith.mulf %124, %121 : vector<4x128xf32>
    %126 = arith.subf %123, %125 : vector<4x128xf32>
    %127 = arith.addf %111, %126 : vector<4x128xf32>
    %128 = vector.broadcast %119 : vector<1x128xf32> to vector<4x128xf32>
    %129 = arith.mulf %128, %120 : vector<4x128xf32>
    %130 = vector.broadcast %118 : vector<1x128xf32> to vector<4x128xf32>
    %131 = arith.mulf %130, %121 : vector<4x128xf32>
    %132 = arith.addf %129, %131 : vector<4x128xf32>
    %133 = arith.addf %117, %132 : vector<4x128xf32>
    %c4_61 = arith.constant 4 : index
    %c0_62 = arith.constant 0 : index
    %134 = vector.load %arg5[%c4_61, %c0_62] : memref<8x128xf32, #tpu.memory_space<vmem>>, vector<4x128xf32>
    tpu.vector_store %arg5[%c4_61, %c0_62], %127 {strides = array<i32>} : memref<8x128xf32, #tpu.memory_space<vmem>>, vector<4x128xf32>,
    %c4_63 = arith.constant 4 : index
    %c0_64 = arith.constant 0 : index
    %135 = vector.load %arg6[%c4_63, %c0_64] : memref<8x128xf32, #tpu.memory_space<vmem>>, vector<4x128xf32>
    tpu.vector_store %arg6[%c4_63, %c0_64], %133 {strides = array<i32>} : memref<8x128xf32, #tpu.memory_space<vmem>>, vector<4x128xf32>,
    return
  }
  func.func @transform_0(%arg0: i32) -> (i32, i32) {
    %c0_i32 = arith.constant 0 : i32
    %c0_i32_0 = arith.constant 0 : i32
    return %c0_i32, %arg0 : i32, i32
  }
  func.func @transform_1(%arg0: i32) -> (i32, i32) {
    %c0_i32 = arith.constant 0 : i32
    %c0_i32_0 = arith.constant 0 : i32
    return %c0_i32, %arg0 : i32, i32
  }
  func.func @transform_2(%arg0: i32) -> (i32, i32) {
    %c0_i32 = arith.constant 0 : i32
    %c0_i32_0 = arith.constant 0 : i32
    return %c0_i32, %arg0 : i32, i32
  }
  func.func @transform_3(%arg0: i32) -> (i32, i32) {
    %c0_i32 = arith.constant 0 : i32
    %c0_i32_0 = arith.constant 0 : i32
    return %c0_i32, %arg0 : i32, i32
  }
  func.func @transform_4(%arg0: i32) -> (i32, i32) {
    %c0_i32 = arith.constant 0 : i32
    %c0_i32_0 = arith.constant 0 : i32
    return %c0_i32, %arg0 : i32, i32
  }
  func.func @transform_5(%arg0: i32) -> (i32, i32) {
    %c0_i32 = arith.constant 0 : i32
    %c0_i32_0 = arith.constant 0 : i32
    return %c0_i32, %arg0 : i32, i32
  }
}

</mosaic_0001>

<llo_original>
// kernel: spectral_conv3d_fast_prepared.1
$region0: #{spectral_conv3d_fast_prepared.1}
  #allocation0 [shape = 'u32[]', space=smem, size = 0x4, offset = 0x4, fixed_abs, tag = 'smem constant byte address 0x4 - core index']
  #allocation1 [shape = 'u32[144,128]{1,0:T(1,128)}', space=vmem, size = 0x12000, scoped, tag = 'internal scratch']
  %s0 = inlined_call_operand.vmem [shape: f32[8,256], index: 0, kind: input, shape index: {}]
  %s1 = inlined_call_operand.vmem [shape: f32[8,256], index: 1, kind: input, shape index: {}]
  %s2 = inlined_call_operand.vmem [shape: f32[16,256], index: 2, kind: input, shape index: {}]
  %s3 = inlined_call_operand.vmem [shape: f32[16,256], index: 3, kind: input, shape index: {}]
  %s4 = inlined_call_operand.vmem [shape: f32[8,256], index: 4, kind: output, shape index: {0}]
  %s5 = inlined_call_operand.vmem [shape: f32[8,256], index: 5, kind: output, shape index: {1}]
  %6 = xla_tuple %s4, %s5
  %s7 = sld [smem:[#allocation0]]
  $region133: #{spectral_conv3d_fast_prepared.1} parent=0
    _
  %s9 = ssub.s32 1, %s7
  %s10 = scalar_select 0, %s9, %s7
  $region1: #{spectral_conv3d_fast_prepared.1} parent=0
    #allocation2 [shape = 'u8[16384]{0}', space=vmem, size = 0x4000, scoped, tag = 'input window, operand 2']
    #allocation3 [shape = 'u8[16384]{0}', space=vmem, size = 0x4000, scoped, tag = 'input window, operand 3']
    loop: start=0, step=1, limit=4
    $region2: #{spectral_conv3d_fast_prepared.1} parent=1 // loop_pre_header
      _
    $region3: #{spectral_conv3d_fast_prepared.1} parent=1 // loop_header
      %s12 = sphi 0, %s16
      %p13 = scmp.ge.s32.totalorder %s12, 4
      %s22 = sphi 0, %s24
      %s25 = sphi 0, %s22
      %s26 = sphi 0, %s25
      %s42 = sphi 0, %s26
      %s48 = sphi 0, %s50
      %s51 = sphi 0, %s48
      %s52 = sphi 0, %s51
      %s68 = sphi 0, %s52
      %s74 = sphi 0, %s76
      %s77 = sphi 0, %s74
      %s78 = sphi 0, %s77
      %s94 = sphi 0, %s78
      %s100 = sphi 0, %s102
      %s103 = sphi 0, %s100
      %s104 = sphi 0, %s103
      %s120 = sphi 0, %s104
      %s126 = sphi 0, %s128
      %s129 = sphi 0, %s126
      %s130 = sphi 0, %s129
      %s146 = sphi 0, %s130
      %s152 = sphi 0, %s154
      %s155 = sphi 0, %s152
      %s156 = sphi 0, %s155
      %s172 = sphi 0, %s156
    $region4: #{spectral_conv3d_fast_prepared.1} parent=1 // loop_header_branch
      %15 = sbr.rel (%p13) target = $region8
    $region5: #{spectral_conv3d_fast_prepared.1} parent=1 // loop_body
      %s17 = ssub.s32 %s12, 1
      %s18 = ssub.s32 %s12, 2
      %s19 = sadd.s32 %s12, 1
      %s20 = ssub.s32 %s12, %s19
      %p21 = scmp.eq.s32.totalorder %s20, 0
      %s23 = sadd.s32 %s22, 1
      %s24 = scalar_select %p21, %s22, %s23
      %p27 = pneg %p21
      %p28 = scmp.eq.s32.totalorder %s12, 1
      %p29 = por %p27, %p28
      %p30 = scmp.ne.s32.totalorder %s22, %s25
      %p31 = scmp.eq.s32.totalorder %s12, 0
      %p32 = por %p30, %p31
      %p33 = scmp.ne.s32.totalorder %s22, %s25
      %p34 = scmp.eq.s32.totalorder %s17, 1
      %p35 = por %p33, %p34
      %p36 = scmp.ne.s32.totalorder %s25, %s26
      %p37 = scmp.eq.s32.totalorder %s17, 0
      %p38 = por %p36, %p37
      %p39 = scmp.ne.s32.totalorder %s25, %s26
      %p40 = scmp.eq.s32.totalorder %s18, 1
      %p41 = por %p39, %p40
      %p43 = scmp.ne.s32.totalorder %s26, %s42
      %p44 = scmp.eq.s32.totalorder %s18, 0
      %p45 = por %p43, %p44
      %s46 = ssub.s32 %s12, %s19
      %p47 = scmp.eq.s32.totalorder %s46, 0
      %s49 = sadd.s32 %s48, 1
      %s50 = scalar_select %p47, %s48, %s49
      %p53 = pneg %p47
      %p54 = scmp.eq.s32.totalorder %s12, 1
      %p55 = por %p53, %p54
      %p56 = scmp.ne.s32.totalorder %s48, %s51
      %p57 = scmp.eq.s32.totalorder %s12, 0
      %p58 = por %p56, %p57
      %p59 = scmp.ne.s32.totalorder %s48, %s51
      %p60 = scmp.eq.s32.totalorder %s17, 1
      %p61 = por %p59, %p60
      %p62 = scmp.ne.s32.totalorder %s51, %s52
      %p63 = scmp.eq.s32.totalorder %s17, 0
      %p64 = por %p62, %p63
      %p65 = scmp.ne.s32.totalorder %s51, %s52
      %p66 = scmp.eq.s32.totalorder %s18, 1
      %p67 = por %p65, %p66
      %p69 = scmp.ne.s32.totalorder %s52, %s68
      %p70 = scmp.eq.s32.totalorder %s18, 0
      %p71 = por %p69, %p70
      %s72 = ssub.s32 %s12, %s19
      %p73 = scmp.eq.s32.totalorder %s72, 0
      %s75 = sadd.s32 %s74, 1
      %s76 = scalar_select %p73, %s74, %s75
      %p79 = pneg %p73
      %p80 = scmp.eq.s32.totalorder %s12, 1
      %p81 = por %p79, %p80
      %p82 = scmp.ne.s32.totalorder %s74, %s77
      %p83 = scmp.eq.s32.totalorder %s12, 0
      %p84 = por %p82, %p83
      %p85 = scmp.ne.s32.totalorder %s74, %s77
      %p86 = scmp.eq.s32.totalorder %s17, 1
      %p87 = por %p85, %p86
      %p88 = scmp.ne.s32.totalorder %s77, %s78
      %p89 = scmp.eq.s32.totalorder %s17, 0
      %p90 = por %p88, %p89
      %p91 = scmp.ne.s32.totalorder %s77, %s78
      %p92 = scmp.eq.s32.totalorder %s18, 1
      %p93 = por %p91, %p92
      %p95 = scmp.ne.s32.totalorder %s78, %s94
      %p96 = scmp.eq.s32.totalorder %s18, 0
      %p97 = por %p95, %p96
      %s98 = ssub.s32 %s12, %s19
      %p99 = scmp.eq.s32.totalorder %s98, 0
      %s101 = sadd.s32 %s100, 1
      %s102 = scalar_select %p99, %s100, %s101
      %p105 = pneg %p99
      %p106 = scmp.eq.s32.totalorder %s12, 1
      %p107 = por %p105, %p106
      %p108 = scmp.ne.s32.totalorder %s100, %s103
      %p109 = scmp.eq.s32.totalorder %s12, 0
      %p110 = por %p108, %p109
      %p111 = scmp.ne.s32.totalorder %s100, %s103
      %p112 = scmp.eq.s32.totalorder %s17, 1
      %p113 = por %p111, %p112
      %p114 = scmp.ne.s32.totalorder %s103, %s104
      %p115 = scmp.eq.s32.totalorder %s17, 0
      %p116 = por %p114, %p115
      %p117 = scmp.ne.s32.totalorder %s103, %s104
      %p118 = scmp.eq.s32.totalorder %s18, 1
      %p119 = por %p117, %p118
      %p121 = scmp.ne.s32.totalorder %s104, %s120
      %p122 = scmp.eq.s32.totalorder %s18, 0
      %p123 = por %p121, %p122
      %s124 = ssub.s32 %s12, %s19
      %p125 = scmp.eq.s32.totalorder %s124, 0
      %s127 = sadd.s32 %s126, 1
      %s128 = scalar_select %p125, %s126, %s127
      %p131 = pneg %p125
      %p132 = scmp.eq.s32.totalorder %s12, 1
      %p133 = por %p131, %p132
      %p134 = scmp.ne.s32.totalorder %s126, %s129
      %p135 = scmp.eq.s32.totalorder %s12, 0
      %p136 = por %p134, %p135
      %p137 = scmp.ne.s32.totalorder %s126, %s129
      %p138 = scmp.eq.s32.totalorder %s17, 1
      %p139 = por %p137, %p138
      %p140 = scmp.ne.s32.totalorder %s129, %s130
      %p141 = scmp.eq.s32.totalorder %s17, 0
      %p142 = por %p140, %p141
      %p143 = scmp.ne.s32.totalorder %s129, %s130
      %p144 = scmp.eq.s32.totalorder %s18, 1
      %p145 = por %p143, %p144
      %p147 = scmp.ne.s32.totalorder %s130, %s146
      %p148 = scmp.eq.s32.totalorder %s18, 0
      %p149 = por %p147, %p148
      %s150 = ssub.s32 %s12, %s19
      %p151 = scmp.eq.s32.totalorder %s150, 0
      %s153 = sadd.s32 %s152, 1
      %s154 = scalar_select %p151, %s152, %s153
      %p157 = pneg %p151
      %p158 = scmp.eq.s32.totalorder %s12, 1
      %p159 = por %p157, %p158
      %p160 = scmp.ne.s32.totalorder %s152, %s155
      %p161 = scmp.eq.s32.totalorder %s12, 0
      %p162 = por %p160, %p161
      %p163 = scmp.ne.s32.totalorder %s152, %s155
      %p164 = scmp.eq.s32.totalorder %s17, 1
      %p165 = por %p163, %p164
      %p166 = scmp.ne.s32.totalorder %s155, %s156
      %p167 = scmp.eq.s32.totalorder %s17, 0
      %p168 = por %p166, %p167
      %p169 = scmp.ne.s32.totalorder %s155, %s156
      %p170 = scmp.eq.s32.totalorder %s18, 1
      %p171 = por %p169, %p170
      %p173 = scmp.ne.s32.totalorder %s156, %s172
      %p174 = scmp.eq.s32.totalorder %s18, 0
      %p175 = por %p173, %p174
      %p176 = scmp.le.s32.totalorder 1, %s12
      %p177 = scmp.lt.s32.totalorder %s12, 3
      %p178 = pnand %p176, %p177
      %p179 = pneg %p178
      // Predicated region
      $region9: #{spectral_conv3d_fast_prepared.1} parent=5 // pred_check
        _
      $region10: #{spectral_conv3d_fast_prepared.1} parent=5 // pred_check_branch
        %181 = sbr.rel (%p178) target = $region12
      $region11: #{spectral_conv3d_fast_prepared.1} parent=5 // pred_region
        %s182 = ssub.s32 %s12, 1
      $region12: #{spectral_conv3d_fast_prepared.1} parent=5 // pred_fallthru
        _
      %p183 = scmp.lt.s32.totalorder %s12, 2
      // Predicated region
      $region13: #{spectral_conv3d_fast_prepared.1} parent=5 // pred_check
        %p184 = pneg %p183
      $region14: #{spectral_conv3d_fast_prepared.1} parent=5 // pred_check_branch
        %186 = sbr.rel (%p184) target = $region16
      $region15: #{spectral_conv3d_fast_prepared.1} parent=5 // pred_region
        // Predicated region
        $region17: #{spectral_conv3d_fast_prepared.1} parent=15 // pred_check
          %p187 = pneg %p32
        $region18: #{spectral_conv3d_fast_prepared.1} parent=15 // pred_check_branch
          %189 = sbr.rel (%p187) target = $region20
        $region19: #{spectral_conv3d_fast_prepared.1} parent=15 // pred_region
          %p190 = scmp.lt.s32.totalorder %s12, 1
          %s191 = scalar_select %p190, %s12, 1
          %s192 = smul.addr %s191, 8
          %s193 = scalar_lea.vmem %s0, %s192
        $region20: #{spectral_conv3d_fast_prepared.1} parent=15 // pred_fallthru
          _
        // Predicated region
        $region21: #{spectral_conv3d_fast_prepared.1} parent=15 // pred_check
          %p194 = pneg %p58
        $region22: #{spectral_conv3d_fast_prepared.1} parent=15 // pred_check_branch
          %196 = sbr.rel (%p194) target = $region24
        $region23: #{spectral_conv3d_fast_prepared.1} parent=15 // pred_region
          %p197 = scmp.lt.s32.totalorder %s12, 1
          %s198 = scalar_select %p197, %s12, 1
          %s199 = smul.addr %s198, 8
          %s200 = scalar_lea.vmem %s1, %s199
        $region24: #{spectral_conv3d_fast_prepared.1} parent=15 // pred_fallthru
          _
        // Predicated region
        $region25: #{spectral_conv3d_fast_prepared.1} parent=15 // pred_check
          %p201 = pneg %p84
        $region26: #{spectral_conv3d_fast_prepared.1} parent=15 // pred_check_branch
          %203 = sbr.rel (%p201) target = $region28
        $region27: #{spectral_conv3d_fast_prepared.1} parent=15 // pred_region
          %s204 = sand.u32 %s74, 1
          %s205 = sand.u32 %s74, 1
          %s206 = smul.addr %s205, 16
          %s207 = scalar_lea.vmem [#allocation2], %s206
          %s208 = smul.addr %s12, 8
          %s209 = scalar_lea.vmem %s2, %s208
          // Predicated region
          $region29: #{spectral_conv3d_fast_prepared.1} parent=27 // pred_check
            _
          $region30: #{spectral_conv3d_fast_prepared.1} parent=27 // pred_check_branch
            %211 = sbr.rel (0) target = $region32
          $region31: #{spectral_conv3d_fast_prepared.1} parent=27 // pred_region
            // Predicated region
            $region33: #{spectral_conv3d_fast_prepared.1} parent=31 // pred_check
              _
            $region34: #{spectral_conv3d_fast_prepared.1} parent=31 // pred_check_branch
              %213 = sbr.rel (0) target = $region36
            $region35: #{spectral_conv3d_fast_prepared.1} parent=31 // pred_region
              // Predicated region
              $region48: #{spectral_conv3d_fast_prepared.1} parent=35 // pred_check
                _
              $region49: #{spectral_conv3d_fast_prepared.1} parent=35 // pred_check_branch
                %230 = sbr.rel (0) target = $region51
              $region50: #{spectral_conv3d_fast_prepared.1} parent=35 // pred_region
                loop: start=0, step=1, limit=1
                $region52: #{spectral_conv3d_fast_prepared.1} parent=50 // loop_pre_header
                  _
                $region53: #{spectral_conv3d_fast_prepared.1} parent=50 // loop_header
                  %s232 = sphi 0, %s236
                  %p233 = scmp.ge.s32.totalorder %s232, 1
                  %s237 = sphi %s209, %s209
                  %s238 = sphi %s207, %s207
                $region54: #{spectral_conv3d_fast_prepared.1} parent=50 // loop_header_branch
                  %235 = sbr.rel (%p233) target = $region58
                $region55: #{spectral_conv3d_fast_prepared.1} parent=50 // loop_body
                  %v239 = vld [vmem:[%s237] sm:$0xff]
                  %240 = vst [vmem:[%s238] sm:$0xff] %v239
                  %v241 = vld [vmem:[%s237 + $0x10] sm:$0xff]
                  %242 = vst [vmem:[%s238 + $0x8] sm:$0xff] %v241
                $region56: #{spectral_conv3d_fast_prepared.1} parent=50 // loop_footer
                  %s236 = sadd.s32 1, %s232
                $region57: #{spectral_conv3d_fast_prepared.1} parent=50 // loop_footer_branch
                  %231 = sbr.rel target = $region53
                $region58: #{spectral_conv3d_fast_prepared.1} parent=50 // loop_exit
                  _
              $region51: #{spectral_conv3d_fast_prepared.1} parent=35 // pred_fallthru
                _
              // Predicated region
              $region59: #{spectral_conv3d_fast_prepared.1} parent=35 // pred_check
                _
              $region60: #{spectral_conv3d_fast_prepared.1} parent=35 // pred_check_branch
                %244 = sbr.rel target = $region62
              $region61: #{spectral_conv3d_fast_prepared.1} parent=35 // pred_region
                _
              $region62: #{spectral_conv3d_fast_prepared.1} parent=35 // pred_fallthru
                _
            $region36: #{spectral_conv3d_fast_prepared.1} parent=31 // pred_fallthru
              _
            // Predicated region
            $region37: #{spectral_conv3d_fast_prepared.1} parent=31 // pred_check
              _
            $region38: #{spectral_conv3d_fast_prepared.1} parent=31 // pred_check_branch
              %215 = sbr.rel target = $region40
            $region39: #{spectral_conv3d_fast_prepared.1} parent=31 // pred_region
              loop: start=0, step=1, limit=1
              $region41: #{spectral_conv3d_fast_prepared.1} parent=39 // loop_pre_header
                _
              $region42: #{spectral_conv3d_fast_prepared.1} parent=39 // loop_header
                %s218 = sphi 0, %s222
                %p219 = scmp.ge.s32.totalorder %s218, 1
                %s223 = sphi %s209, %s209
                %s224 = sphi %s207, %s207
              $region43: #{spectral_conv3d_fast_prepared.1} parent=39 // loop_header_branch
                %221 = sbr.rel (%p219) target = $region47
              $region44: #{spectral_conv3d_fast_prepared.1} parent=39 // loop_body
                %v225 = vld [vmem:[%s223] sm:$0xff]
                %226 = vst [vmem:[%s224] sm:$0xff] %v225
                %v227 = vld [vmem:[%s223 + $0x10] sm:$0xff]
                %228 = vst [vmem:[%s224 + $0x8] sm:$0xff] %v227
              $region45: #{spectral_conv3d_fast_prepared.1} parent=39 // loop_footer
                %s222 = sadd.s32 1, %s218
              $region46: #{spectral_conv3d_fast_prepared.1} parent=39 // loop_footer_branch
                %217 = sbr.rel target = $region42
              $region47: #{spectral_conv3d_fast_prepared.1} parent=39 // loop_exit
                _
            $region40: #{spectral_conv3d_fast_prepared.1} parent=31 // pred_fallthru
              _
          $region32: #{spectral_conv3d_fast_prepared.1} parent=27 // pred_fallthru
            _
          %245 = vnop
        $region28: #{spectral_conv3d_fast_prepared.1} parent=15 // pred_fallthru
          _
        // Predicated region
        $region63: #{spectral_conv3d_fast_prepared.1} parent=15 // pred_check
          %p246 = pneg %p110
        $region64: #{spectral_conv3d_fast_prepared.1} parent=15 // pred_check_branch
          %248 = sbr.rel (%p246) target = $region66
        $region65: #{spectral_conv3d_fast_prepared.1} parent=15 // pred_region
          %s249 = sand.u32 %s100, 1
          %s250 = sand.u32 %s100, 1
          %s251 = smul.addr %s250, 16
          %s252 = scalar_lea.vmem [#allocation3], %s251
          %s253 = smul.addr %s12, 8
          %s254 = scalar_lea.vmem %s3, %s253
          // Predicated region
          $region67: #{spectral_conv3d_fast_prepared.1} parent=65 // pred_check
            _
          $region68: #{spectral_conv3d_fast_prepared.1} parent=65 // pred_check_branch
            %256 = sbr.rel (0) target = $region70
          $region69: #{spectral_conv3d_fast_prepared.1} parent=65 // pred_region
            // Predicated region
            $region71: #{spectral_conv3d_fast_prepared.1} parent=69 // pred_check
              _
            $region72: #{spectral_conv3d_fast_prepared.1} parent=69 // pred_check_branch
              %258 = sbr.rel (0) target = $region74
            $region73: #{spectral_conv3d_fast_prepared.1} parent=69 // pred_region
              // Predicated region
              $region86: #{spectral_conv3d_fast_prepared.1} parent=73 // pred_check
                _
              $region87: #{spectral_conv3d_fast_prepared.1} parent=73 // pred_check_branch
                %275 = sbr.rel (0) target = $region89
              $region88: #{spectral_conv3d_fast_prepared.1} parent=73 // pred_region
                loop: start=0, step=1, limit=1
                $region90: #{spectral_conv3d_fast_prepared.1} parent=88 // loop_pre_header
                  _
                $region91: #{spectral_conv3d_fast_prepared.1} parent=88 // loop_header
                  %s277 = sphi 0, %s281
                  %p278 = scmp.ge.s32.totalorder %s277, 1
                  %s282 = sphi %s254, %s254
                  %s283 = sphi %s252, %s252
                $region92: #{spectral_conv3d_fast_prepared.1} parent=88 // loop_header_branch
                  %280 = sbr.rel (%p278) target = $region96
                $region93: #{spectral_conv3d_fast_prepared.1} parent=88 // loop_body
                  %v284 = vld [vmem:[%s282] sm:$0xff]
                  %285 = vst [vmem:[%s283] sm:$0xff] %v284
                  %v286 = vld [vmem:[%s282 + $0x10] sm:$0xff]
                  %287 = vst [vmem:[%s283 + $0x8] sm:$0xff] %v286
                $region94: #{spectral_conv3d_fast_prepared.1} parent=88 // loop_footer
                  %s281 = sadd.s32 1, %s277
                $region95: #{spectral_conv3d_fast_prepared.1} parent=88 // loop_footer_branch
                  %276 = sbr.rel target = $region91
                $region96: #{spectral_conv3d_fast_prepared.1} parent=88 // loop_exit
                  _
              $region89: #{spectral_conv3d_fast_prepared.1} parent=73 // pred_fallthru
                _
              // Predicated region
              $region97: #{spectral_conv3d_fast_prepared.1} parent=73 // pred_check
                _
              $region98: #{spectral_conv3d_fast_prepared.1} parent=73 // pred_check_branch
                %289 = sbr.rel target = $region100
              $region99: #{spectral_conv3d_fast_prepared.1} parent=73 // pred_region
                _
              $region100: #{spectral_conv3d_fast_prepared.1} parent=73 // pred_fallthru
                _
            $region74: #{spectral_conv3d_fast_prepared.1} parent=69 // pred_fallthru
              _
            // Predicated region
            $region75: #{spectral_conv3d_fast_prepared.1} parent=69 // pred_check
              _
            $region76: #{spectral_conv3d_fast_prepared.1} parent=69 // pred_check_branch
              %260 = sbr.rel target = $region78
            $region77: #{spectral_conv3d_fast_prepared.1} parent=69 // pred_region
              loop: start=0, step=1, limit=1
              $region79: #{spectral_conv3d_fast_prepared.1} parent=77 // loop_pre_header
                _
              $region80: #{spectral_conv3d_fast_prepared.1} parent=77 // loop_header
                %s263 = sphi 0, %s267
                %p264 = scmp.ge.s32.totalorder %s263, 1
                %s268 = sphi %s254, %s254
                %s269 = sphi %s252, %s252
              $region81: #{spectral_conv3d_fast_prepared.1} parent=77 // loop_header_branch
                %266 = sbr.rel (%p264) target = $region85
              $region82: #{spectral_conv3d_fast_prepared.1} parent=77 // loop_body
                %v270 = vld [vmem:[%s268] sm:$0xff]
                %271 = vst [vmem:[%s269] sm:$0xff] %v270
                %v272 = vld [vmem:[%s268 + $0x10] sm:$0xff]
                %273 = vst [vmem:[%s269 + $0x8] sm:$0xff] %v272
              $region83: #{spectral_conv3d_fast_prepared.1} parent=77 // loop_footer
                %s267 = sadd.s32 1, %s263
              $region84: #{spectral_conv3d_fast_prepared.1} parent=77 // loop_footer_branch
                %262 = sbr.rel target = $region80
              $region85: #{spectral_conv3d_fast_prepared.1} parent=77 // loop_exit
                _
            $region78: #{spectral_conv3d_fast_prepared.1} parent=69 // pred_fallthru
              _
          $region70: #{spectral_conv3d_fast_prepared.1} parent=65 // pred_fallthru
            _
          %290 = vnop
        $region66: #{spectral_conv3d_fast_prepared.1} parent=15 // pred_fallthru
          _
      $region16: #{spectral_conv3d_fast_prepared.1} parent=5 // pred_fallthru
        _
      %p291 = scmp.le.s32.totalorder 1, %s12
      %p292 = scmp.lt.s32.totalorder %s12, 3
      %p293 = pnand %p291, %p292
      %p294 = pneg %p293
      // Predicated region
      $region101: #{spectral_conv3d_fast_prepared.1} parent=5 // pred_check
        _
      $region102: #{spectral_conv3d_fast_prepared.1} parent=5 // pred_check_branch
        %296 = sbr.rel (%p293) target = $region104
      $region103: #{spectral_conv3d_fast_prepared.1} parent=5 // pred_region
        %s297 = ssub.s32 %s12, 1
        %s298 = sand.u32 %s77, 1
        %s299 = sand.u32 %s77, 1
        %s300 = smul.addr %s299, 16
        %s301 = scalar_lea.vmem [#allocation2], %s300
        // Predicated region
        $region105: #{spectral_conv3d_fast_prepared.1} parent=103 // pred_check
          %p302 = pneg %p90
        $region106: #{spectral_conv3d_fast_prepared.1} parent=103 // pred_check_branch
          %304 = sbr.rel (%p302) target = $region108
        $region107: #{spectral_conv3d_fast_prepared.1} parent=103 // pred_region
          _
        $region108: #{spectral_conv3d_fast_prepared.1} parent=103 // pred_fallthru
          _
        %s305 = sand.u32 %s103, 1
        %s306 = sand.u32 %s103, 1
        %s307 = smul.addr %s306, 16
        %s308 = scalar_lea.vmem [#allocation3], %s307
        // Predicated region
        $region109: #{spectral_conv3d_fast_prepared.1} parent=103 // pred_check
          %p309 = pneg %p116
        $region110: #{spectral_conv3d_fast_prepared.1} parent=103 // pred_check_branch
          %311 = sbr.rel (%p309) target = $region112
        $region111: #{spectral_conv3d_fast_prepared.1} parent=103 // pred_region
          _
        $region112: #{spectral_conv3d_fast_prepared.1} parent=103 // pred_fallthru
          _
        %p312 = scmp.lt.s32.totalorder %s17, 1
        %s313 = scalar_select %p312, %s17, 1
        %s314 = smul.addr %s313, 8
        %s315 = scalar_lea.vmem %s0, %s314
        %p316 = pneg %p38
        %p317 = pneg %p35
        %p318 = scmp.lt.s32.totalorder %s17, 1
        %s319 = scalar_select %p318, %s17, 1
        %s320 = smul.addr %s319, 8
        %s321 = scalar_lea.vmem %s1, %s320
        %p322 = pneg %p64
        %p323 = pneg %p61
        %s324 = sand.u32 %s77, 1
        %s325 = sand.u32 %s77, 1
        %s326 = smul.addr %s325, 16
        %s327 = scalar_lea.vmem [#allocation2], %s326
        %p328 = pneg %p90
        %p329 = pneg %p87
        %s330 = sand.u32 %s103, 1
        %s331 = sand.u32 %s103, 1
        %s332 = smul.addr %s331, 16
        %s333 = scalar_lea.vmem [#allocation3], %s332
        %p334 = pneg %p116
        %p335 = pneg %p113
        %p336 = pneg %p142
        %p337 = pneg %p139
        %p338 = scmp.lt.s32.totalorder %s17, 1
        %s339 = scalar_select %p338, %s17, 1
        %s340 = smul.addr %s339, 8
        %s341 = scalar_lea.vmem %s4, %s340
        %p342 = pneg %p168
        %p343 = pneg %p165
        %p344 = scmp.lt.s32.totalorder %s17, 1
        %s345 = scalar_select %p344, %s17, 1
        %s346 = smul.addr %s345, 8
        %s347 = scalar_lea.vmem %s5, %s346
        %p348 = scmp.lt.s32.totalorder %s17, 1
        %s349 = scalar_select %p348, %s17, 1
        %s350 = smul.addr %s349, 8
        %s351 = scalar_lea.vmem %s0, %s350
        %p352 = scmp.lt.s32.totalorder %s17, 1
        %s353 = scalar_select %p352, %s17, 1
        %s354 = smul.addr %s353, 8
        %s355 = scalar_lea.vmem %s1, %s354
        %p356 = scmp.lt.s32.totalorder %s17, 1
        %s357 = scalar_select %p356, %s17, 1
        %s358 = smul.addr %s357, 8
        %s359 = scalar_lea.vmem %s4, %s358
        %p360 = scmp.lt.s32.totalorder %s17, 1
        %s361 = scalar_select %p360, %s17, 1
        %s362 = smul.addr %s361, 8
        %s363 = scalar_lea.vmem %s5, %s362
        %v364 = vld [vmem:[%s351] sm:$0x1]
        %v365 = vld [vmem:[%s355] sm:$0x1]
        %v366 = vld [vmem:[%s301] sm:$0xf]
        %v367 = vld [vmem:[%s308] sm:$0xf]
        %v368 = vlaneseq
        %v369 = vshrl.u32 %v368, 7
        %v370 = vsub.s32 0, %v369
        %v371 = vrot.slane %v364, %v370
        %v372 = vmul.f32 %v371, %v366
        %v373 = vlaneseq
        %v374 = vshrl.u32 %v373, 7
        %v375 = vsub.s32 0, %v374
        %v376 = vrot.slane %v365, %v375
        %v377 = vmul.f32 %v376, %v367
        %v378 = vsub.f32 %v372, %v377
        %v379 = vadd.f32 %v378, 0.0
        %v380 = vmul.f32 %v376, %v366
        %v381 = vmul.f32 %v371, %v367
        %v382 = vadd.f32 %v380, %v381
        %v383 = vadd.f32 %v382, 0.0
        %v384 = vld [vmem:[%s351 + $0x1] sm:$0x1]
        %v385 = vld [vmem:[%s355 + $0x1] sm:$0x1]
        %v386 = vld [vmem:[%s301 + $0x4] sm:$0xf]
        %v387 = vld [vmem:[%s308 + $0x4] sm:$0xf]
        %v388 = vlaneseq
        %v389 = vshrl.u32 %v388, 7
        %v390 = vsub.s32 0, %v389
        %v391 = vrot.slane %v384, %v390
        %v392 = vmul.f32 %v391, %v386
        %v393 = vlaneseq
        %v394 = vshrl.u32 %v393, 7
        %v395 = vsub.s32 0, %v394
        %v396 = vrot.slane %v385, %v395
        %v397 = vmul.f32 %v396, %v387
        %v398 = vsub.f32 %v392, %v397
        %v399 = vadd.f32 %v379, %v398
        %v400 = vmul.f32 %v396, %v386
        %v401 = vmul.f32 %v391, %v387
        %v402 = vadd.f32 %v400, %v401
        %v403 = vadd.f32 %v383, %v402
        %v404 = vld [vmem:[%s351 + $0x2] sm:$0x1]
        %v405 = vld [vmem:[%s355 + $0x2] sm:$0x1]
        %v406 = vld [vmem:[%s301 + $0x8] sm:$0xf]
        %v407 = vld [vmem:[%s308 + $0x8] sm:$0xf]
        %v408 = vlaneseq
        %v409 = vshrl.u32 %v408, 7
        %v410 = vsub.s32 0, %v409
        %v411 = vrot.slane %v404, %v410
        %v412 = vmul.f32 %v411, %v406
        %v413 = vlaneseq
        %v414 = vshrl.u32 %v413, 7
        %v415 = vsub.s32 0, %v414
        %v416 = vrot.slane %v405, %v415
        %v417 = vmul.f32 %v416, %v407
        %v418 = vsub.f32 %v412, %v417
        %v419 = vadd.f32 %v399, %v418
        %v420 = vmul.f32 %v416, %v406
        %v421 = vmul.f32 %v411, %v407
        %v422 = vadd.f32 %v420, %v421
        %v423 = vadd.f32 %v403, %v422
        %v424 = vld [vmem:[%s351 + $0x3] sm:$0x1]
        %v425 = vld [vmem:[%s355 + $0x3] sm:$0x1]
        %v426 = vld [vmem:[%s301 + $0xc] sm:$0xf]
        %v427 = vld [vmem:[%s308 + $0xc] sm:$0xf]
        %v428 = vlaneseq
        %v429 = vshrl.u32 %v428, 7
        %v430 = vsub.s32 0, %v429
        %v431 = vrot.slane %v424, %v430
        %v432 = vmul.f32 %v431, %v426
        %v433 = vlaneseq
        %v434 = vshrl.u32 %v433, 7
        %v435 = vsub.s32 0, %v434
        %v436 = vrot.slane %v425, %v435
        %v437 = vmul.f32 %v436, %v427
        %v438 = vsub.f32 %v432, %v437
        %v439 = vadd.f32 %v419, %v438
        %v440 = vmul.f32 %v436, %v426
        %v441 = vmul.f32 %v431, %v427
        %v442 = vadd.f32 %v440, %v441
        %v443 = vadd.f32 %v423, %v442
        %444 = vst [vmem:[%s359] sm:$0xf] %v439
        %445 = vst [vmem:[%s363] sm:$0xf] %v443
        %v446 = vld [vmem:[%s351 + $0x4] sm:$0x1]
        %v447 = vld [vmem:[%s355 + $0x4] sm:$0x1]
        %v448 = vld [vmem:[%s301] sm:$0xf]
        %v449 = vld [vmem:[%s308] sm:$0xf]
        %v450 = vlaneseq
        %v451 = vshrl.u32 %v450, 7
        %v452 = vsub.s32 0, %v451
        %v453 = vrot.slane %v446, %v452
        %v454 = vmul.f32 %v453, %v448
        %v455 = vlaneseq
        %v456 = vshrl.u32 %v455, 7
        %v457 = vsub.s32 0, %v456
        %v458 = vrot.slane %v447, %v457
        %v459 = vmul.f32 %v458, %v449
        %v460 = vsub.f32 %v454, %v459
        %v461 = vadd.f32 %v460, 0.0
        %v462 = vmul.f32 %v458, %v448
        %v463 = vmul.f32 %v453, %v449
        %v464 = vadd.f32 %v462, %v463
        %v465 = vadd.f32 %v464, 0.0
        %v466 = vld [vmem:[%s351 + $0x5] sm:$0x1]
        %v467 = vld [vmem:[%s355 + $0x5] sm:$0x1]
        %v468 = vld [vmem:[%s301 + $0x4] sm:$0xf]
        %v469 = vld [vmem:[%s308 + $0x4] sm:$0xf]
        %v470 = vlaneseq
        %v471 = vshrl.u32 %v470, 7
        %v472 = vsub.s32 0, %v471
        %v473 = vrot.slane %v466, %v472
        %v474 = vmul.f32 %v473, %v468
        %v475 = vlaneseq
        %v476 = vshrl.u32 %v475, 7
        %v477 = vsub.s32 0, %v476
        %v478 = vrot.slane %v467, %v477
        %v479 = vmul.f32 %v478, %v469
        %v480 = vsub.f32 %v474, %v479
        %v481 = vadd.f32 %v461, %v480
        %v482 = vmul.f32 %v478, %v468
        %v483 = vmul.f32 %v473, %v469
        %v484 = vadd.f32 %v482, %v483
        %v485 = vadd.f32 %v465, %v484
        %v486 = vld [vmem:[%s351 + $0x6] sm:$0x1]
        %v487 = vld [vmem:[%s355 + $0x6] sm:$0x1]
        %v488 = vld [vmem:[%s301 + $0x8] sm:$0xf]
        %v489 = vld [vmem:[%s308 + $0x8] sm:$0xf]
        %v490 = vlaneseq
        %v491 = vshrl.u32 %v490, 7
        %v492 = vsub.s32 0, %v491
        %v493 = vrot.slane %v486, %v492
        %v494 = vmul.f32 %v493, %v488
        %v495 = vlaneseq
        %v496 = vshrl.u32 %v495, 7
        %v497 = vsub.s32 0, %v496
        %v498 = vrot.slane %v487, %v497
        %v499 = vmul.f32 %v498, %v489
        %v500 = vsub.f32 %v494, %v499
        %v501 = vadd.f32 %v481, %v500
        %v502 = vmul.f32 %v498, %v488
        %v503 = vmul.f32 %v493, %v489
        %v504 = vadd.f32 %v502, %v503
        %v505 = vadd.f32 %v485, %v504
        %v506 = vld [vmem:[%s351 + $0x7] sm:$0x1]
        %v507 = vld [vmem:[%s355 + $0x7] sm:$0x1]
        %v508 = vld [vmem:[%s301 + $0xc] sm:$0xf]
        %v509 = vld [vmem:[%s308 + $0xc] sm:$0xf]
        %v510 = vlaneseq
        %v511 = vshrl.u32 %v510, 7
        %v512 = vsub.s32 0, %v511
        %v513 = vrot.slane %v506, %v512
        %v514 = vmul.f32 %v513, %v508
        %v515 = vlaneseq
        %v516 = vshrl.u32 %v515, 7
        %v517 = vsub.s32 0, %v516
        %v518 = vrot.slane %v507, %v517
        %v519 = vmul.f32 %v518, %v509
        %v520 = vsub.f32 %v514, %v519
        %v521 = vadd.f32 %v501, %v520
        %v522 = vmul.f32 %v518, %v508
        %v523 = vmul.f32 %v513, %v509
        %v524 = vadd.f32 %v522, %v523
        %v525 = vadd.f32 %v505, %v524
        %526 = vst [vmem:[%s359 + $0x4] sm:$0xf] %v521
        %527 = vst [vmem:[%s363 + $0x4] sm:$0xf] %v525
        %p528 = scmp.lt.s32.totalorder %s17, 1
        %s529 = scalar_select %p528, %s17, 1
        %s530 = smul.addr %s529, 8
        %s531 = scalar_lea.vmem %s4, %s530
        %p532 = scmp.lt.s32.totalorder %s17, 1
        %s533 = scalar_select %p532, %s17, 1
        %s534 = smul.addr %s533, 8
        %s535 = scalar_lea.vmem %s5, %s534
        // Predicated region
        $region113: #{spectral_conv3d_fast_prepared.1} parent=103 // pred_check
          %p536 = pneg %p139
        $region114: #{spectral_conv3d_fast_prepared.1} parent=103 // pred_check_branch
          %538 = sbr.rel (%p536) target = $region116
        $region115: #{spectral_conv3d_fast_prepared.1} parent=103 // pred_region
          _
        $region116: #{spectral_conv3d_fast_prepared.1} parent=103 // pred_fallthru
          _
        // Predicated region
        $region117: #{spectral_conv3d_fast_prepared.1} parent=103 // pred_check
          %p539 = pneg %p165
        $region118: #{spectral_conv3d_fast_prepared.1} parent=103 // pred_check_branch
          %541 = sbr.rel (%p539) target = $region120
        $region119: #{spectral_conv3d_fast_prepared.1} parent=103 // pred_region
          _
        $region120: #{spectral_conv3d_fast_prepared.1} parent=103 // pred_fallthru
          _
      $region104: #{spectral_conv3d_fast_prepared.1} parent=5 // pred_fallthru
        _
      %p542 = scmp.le.s32.totalorder 2, %s12
      // Predicated region
      $region121: #{spectral_conv3d_fast_prepared.1} parent=5 // pred_check
        %p543 = pneg %p542
      $region122: #{spectral_conv3d_fast_prepared.1} parent=5 // pred_check_branch
        %545 = sbr.rel (%p543) target = $region124
      $region123: #{spectral_conv3d_fast_prepared.1} parent=5 // pred_region
        %s546 = ssub.s32 %s12, 2
        // Predicated region
        $region125: #{spectral_conv3d_fast_prepared.1} parent=123 // pred_check
          %p547 = pneg %p145
        $region126: #{spectral_conv3d_fast_prepared.1} parent=123 // pred_check_branch
          %549 = sbr.rel (%p547) target = $region128
        $region127: #{spectral_conv3d_fast_prepared.1} parent=123 // pred_region
          %p550 = scmp.lt.s32.totalorder %s18, 1
          %s551 = scalar_select %p550, %s18, 1
          %s552 = smul.addr %s551, 8
          %s553 = scalar_lea.vmem %s4, %s552
        $region128: #{spectral_conv3d_fast_prepared.1} parent=123 // pred_fallthru
          _
        // Predicated region
        $region129: #{spectral_conv3d_fast_prepared.1} parent=123 // pred_check
          %p554 = pneg %p171
        $region130: #{spectral_conv3d_fast_prepared.1} parent=123 // pred_check_branch
          %556 = sbr.rel (%p554) target = $region132
        $region131: #{spectral_conv3d_fast_prepared.1} parent=123 // pred_region
          %p557 = scmp.lt.s32.totalorder %s18, 1
          %s558 = scalar_select %p557, %s18, 1
          %s559 = smul.addr %s558, 8
          %s560 = scalar_lea.vmem %s5, %s559
        $region132: #{spectral_conv3d_fast_prepared.1} parent=123 // pred_fallthru
          _
      $region124: #{spectral_conv3d_fast_prepared.1} parent=5 // pred_fallthru
        _
    $region6: #{spectral_conv3d_fast_prepared.1} parent=1 // loop_footer
      %s16 = sadd.s32 1, %s12
    $region7: #{spectral_conv3d_fast_prepared.1} parent=1 // loop_footer_branch
      %11 = sbr.rel target = $region3
    $region8: #{spectral_conv3d_fast_prepared.1} parent=1 // loop_exit
      _

// kernel: reverse.1
$region0: #{reverse.1}
  #allocation0 [shape = 's32[1]{0}', space=sflag, size = 0x4, scoped, tag = 'scoped memory for reverse.1']
  %s0 = inlined_call_operand.vmem [shape: f32[2,4,16,16,7], index: 0, kind: input, shape index: {}]
  %s1 = inlined_call_operand.vmem [shape: f32[2,4,16,16,7], index: 1, kind: output, shape index: {}]
  %s2 = scalar_lea.vmem %s0, 96
  %v3 = vld [vmem:[%s2] sm:$0xff]
  %4 = vst [vmem:[%s1] sm:$0xff] %v3
  %s5 = scalar_lea.vmem %s0, 544
  %v6 = vld [vmem:[%s5] sm:$0xff]
  %s7 = scalar_lea.vmem %s1, 448
  %8 = vst [vmem:[%s7] sm:$0xff] %v6
  %s9 = scalar_lea.vmem %s0, 208
  %v10 = vld [vmem:[%s9] sm:$0xff]
  %s11 = scalar_lea.vmem %s1, 112
  %12 = vst [vmem:[%s11] sm:$0xff] %v10
  %s13 = scalar_lea.vmem %s0, 656
  %v14 = vld [vmem:[%s13] sm:$0xff]
  %s15 = scalar_lea.vmem %s1, 560
  %16 = vst [vmem:[%s15] sm:$0xff] %v14
  %s17 = scalar_lea.vmem %s0, 320
  %v18 = vld [vmem:[%s17] sm:$0xff]
  %s19 = scalar_lea.vmem %s1, 224
  %20 = vst [vmem:[%s19] sm:$0xff] %v18
  %s21 = scalar_lea.vmem %s0, 768
  %v22 = vld [vmem:[%s21] sm:$0xff]
  %s23 = scalar_lea.vmem %s1, 672
  %24 = vst [vmem:[%s23] sm:$0xff] %v22
  %s25 = scalar_lea.vmem %s0, 432
  %v26 = vld [vmem:[%s25] sm:$0xff]
  %s27 = scalar_lea.vmem %s1, 336
  %28 = vst [vmem:[%s27] sm:$0xff] %v26
  %s29 = scalar_lea.vmem %s0, 880
  %v30 = vld [vmem:[%s29] sm:$0xff]
  %s31 = scalar_lea.vmem %s1, 784
  %32 = vst [vmem:[%s31] sm:$0xff] %v30
  %s33 = scalar_lea.vmem %s0, 80
  %v34 = vld [vmem:[%s33] sm:$0xff]
  %s35 = scalar_lea.vmem %s1, 16
  %36 = vst [vmem:[%s35] sm:$0xff] %v34
  %s37 = scalar_lea.vmem %s0, 528
  %v38 = vld [vmem:[%s37] sm:$0xff]
  %s39 = scalar_lea.vmem %s1, 464
  %40 = vst [vmem:[%s39] sm:$0xff] %v38
  %s41 = scalar_lea.vmem %s0, 192
  %v42 = vld [vmem:[%s41] sm:$0xff]
  %s43 = scalar_lea.vmem %s1, 128
  %44 = vst [vmem:[%s43] sm:$0xff] %v42
  %s45 = scalar_lea.vmem %s0, 640
  %v46 = vld [vmem:[%s45] sm:$0xff]
  %s47 = scalar_lea.vmem %s1, 576
  %48 = vst [vmem:[%s47] sm:$0xff] %v46
  %s49 = scalar_lea.vmem %s0, 304
  %v50 = vld [vmem:[%s49] sm:$0xff]
  %s51 = scalar_lea.vmem %s1, 240
  %52 = vst [vmem:[%s51] sm:$0xff] %v50
  %s53 = scalar_lea.vmem %s0, 752
  %v54 = vld [vmem:[%s53] sm:$0xff]
  %s55 = scalar_lea.vmem %s1, 688
  %56 = vst [vmem:[%s55] sm:$0xff] %v54
  %s57 = scalar_lea.vmem %s0, 416
  %v58 = vld [vmem:[%s57] sm:$0xff]
  %s59 = scalar_lea.vmem %s1, 352
  %60 = vst [vmem:[%s59] sm:$0xff] %v58
  %s61 = scalar_lea.vmem %s0, 864
  %v62 = vld [vmem:[%s61] sm:$0xff]
  %s63 = scalar_lea.vmem %s1, 800
  %64 = vst [vmem:[%s63] sm:$0xff] %v62
  %s65 = scalar_lea.vmem %s0, 64
  %v66 = vld [vmem:[%s65] sm:$0xff]
  %s67 = scalar_lea.vmem %s1, 32
  %68 = vst [vmem:[%s67] sm:$0xff] %v66
  %s69 = scalar_lea.vmem %s0, 512
  %v70 = vld [vmem:[%s69] sm:$0xff]
  %s71 = scalar_lea.vmem %s1, 480
  %72 = vst [vmem:[%s71] sm:$0xff] %v70
  %s73 = scalar_lea.vmem %s0, 176
  %v74 = vld [vmem:[%s73] sm:$0xff]
  %s75 = scalar_lea.vmem %s1, 144
  %76 = vst [vmem:[%s75] sm:$0xff] %v74
  %s77 = scalar_lea.vmem %s0, 624
  %v78 = vld [vmem:[%s77] sm:$0xff]
  %s79 = scalar_lea.vmem %s1, 592
  %80 = vst [vmem:[%s79] sm:$0xff] %v78
  %s81 = scalar_lea.vmem %s0, 288
  %v82 = vld [vmem:[%s81] sm:$0xff]
  %s83 = scalar_lea.vmem %s1, 256
  %84 = vst [vmem:[%s83] sm:$0xff] %v82
  %s85 = scalar_lea.vmem %s0, 736
  %v86 = vld [vmem:[%s85] sm:$0xff]
  %s87 = scalar_lea.vmem %s1, 704
  %88 = vst [vmem:[%s87] sm:$0xff] %v86
  %s89 = scalar_lea.vmem %s0, 400
  %v90 = vld [vmem:[%s89] sm:$0xff]
  %s91 = scalar_lea.vmem %s1, 368
  %92 = vst [vmem:[%s91] sm:$0xff] %v90
  %s93 = scalar_lea.vmem %s0, 848
  %v94 = vld [vmem:[%s93] sm:$0xff]
  %s95 = scalar_lea.vmem %s1, 816
  %96 = vst [vmem:[%s95] sm:$0xff] %v94
  %s97 = scalar_lea.vmem %s0, 48
  %v98 = vld [vmem:[%s97] sm:$0xff]
  %s99 = scalar_lea.vmem %s1, 48
  %100 = vst [vmem:[%s99] sm:$0xff] %v98
  %s101 = scalar_lea.vmem %s0, 496
  %v102 = vld [vmem:[%s101] sm:$0xff]
  %s103 = scalar_lea.vmem %s1, 496
  %104 = vst [vmem:[%s103] sm:$0xff] %v102
  %s105 = scalar_lea.vmem %s0, 160
  %v106 = vld [vmem:[%s105] sm:$0xff]
  %s107 = scalar_lea.vmem %s1, 160
  %108 = vst [vmem:[%s107] sm:$0xff] %v106
  %s109 = scalar_lea.vmem %s0, 608
  %v110 = vld [vmem:[%s109] sm:$0xff]
  %s111 = scalar_lea.vmem %s1, 608
  %112 = vst [vmem:[%s111] sm:$0xff] %v110
  %s113 = scalar_lea.vmem %s0, 272
  %v114 = vld [vmem:[%s113] sm:$0xff]
  %s115 = scalar_lea.vmem %s1, 272
  %116 = vst [vmem:[%s115] sm:$0xff] %v114
  %s117 = scalar_lea.vmem %s0, 720
  %v118 = vld [vmem:[%s117] sm:$0xff]
  %s119 = scalar_lea.vmem %s1, 720
  %120 = vst [vmem:[%s119] sm:$0xff] %v118
  %s121 = scalar_lea.vmem %s0, 384
  %v122 = vld [vmem:[%s121] sm:$0xff]
  %s123 = scalar_lea.vmem %s1, 384
  %124 = vst [vmem:[%s123] sm:$0xff] %v122
  %s125 = scalar_lea.vmem %s0, 832
  %v126 = vld [vmem:[%s125] sm:$0xff]
  %s127 = scalar_lea.vmem %s1, 832
  %128 = vst [vmem:[%s127] sm:$0xff] %v126
  %s129 = scalar_lea.vmem %s0, 32
  %v130 = vld [vmem:[%s129] sm:$0xff]
  %s131 = scalar_lea.vmem %s1, 64
  %132 = vst [vmem:[%s131] sm:$0xff] %v130
  %s133 = scalar_lea.vmem %s0, 480
  %v134 = vld [vmem:[%s133] sm:$0xff]
  %s135 = scalar_lea.vmem %s1, 512
  %136 = vst [vmem:[%s135] sm:$0xff] %v134
  %s137 = scalar_lea.vmem %s0, 144
  %v138 = vld [vmem:[%s137] sm:$0xff]
  %s139 = scalar_lea.vmem %s1, 176
  %140 = vst [vmem:[%s139] sm:$0xff] %v138
  %s141 = scalar_lea.vmem %s0, 592
  %v142 = vld [vmem:[%s141] sm:$0xff]
  %s143 = scalar_lea.vmem %s1, 624
  %144 = vst [vmem:[%s143] sm:$0xff] %v142
  %s145 = scalar_lea.vmem %s0, 256
  %v146 = vld [vmem:[%s145] sm:$0xff]
  %s147 = scalar_lea.vmem %s1, 288
  %148 = vst [vmem:[%s147] sm:$0xff] %v146
  %s149 = scalar_lea.vmem %s0, 704
  %v150 = vld [vmem:[%s149] sm:$0xff]
  %s151 = scalar_lea.vmem %s1, 736
  %152 = vst [vmem:[%s151] sm:$0xff] %v150
  %s153 = scalar_lea.vmem %s0, 368
  %v154 = vld [vmem:[%s153] sm:$0xff]
  %s155 = scalar_lea.vmem %s1, 400
  %156 = vst [vmem:[%s155] sm:$0xff] %v154
  %s157 = scalar_lea.vmem %s0, 816
  %v158 = vld [vmem:[%s157] sm:$0xff]
  %s159 = scalar_lea.vmem %s1, 848
  %160 = vst [vmem:[%s159] sm:$0xff] %v158
  %s161 = scalar_lea.vmem %s0, 16
  %v162 = vld [vmem:[%s161] sm:$0xff]
  %s163 = scalar_lea.vmem %s1, 80
  %164 = vst [vmem:[%s163] sm:$0xff] %v162
  %s165 = scalar_lea.vmem %s0, 464
  %v166 = vld [vmem:[%s165] sm:$0xff]
  %s167 = scalar_lea.vmem %s1, 528
  %168 = vst [vmem:[%s167] sm:$0xff] %v166
  %s169 = scalar_lea.vmem %s0, 128
  %v170 = vld [vmem:[%s169] sm:$0xff]
  %s171 = scalar_lea.vmem %s1, 192
  %172 = vst [vmem:[%s171] sm:$0xff] %v170
  %s173 = scalar_lea.vmem %s0, 576
  %v174 = vld [vmem:[%s173] sm:$0xff]
  %s175 = scalar_lea.vmem %s1, 640
  %176 = vst [vmem:[%s175] sm:$0xff] %v174
  %s177 = scalar_lea.vmem %s0, 240
  %v178 = vld [vmem:[%s177] sm:$0xff]
  %s179 = scalar_lea.vmem %s1, 304
  %180 = vst [vmem:[%s179] sm:$0xff] %v178
  %s181 = scalar_lea.vmem %s0, 688
  %v182 = vld [vmem:[%s181] sm:$0xff]
  %s183 = scalar_lea.vmem %s1, 752
  %184 = vst [vmem:[%s183] sm:$0xff] %v182
  %s185 = scalar_lea.vmem %s0, 352
  %v186 = vld [vmem:[%s185] sm:$0xff]
  %s187 = scalar_lea.vmem %s1, 416
  %188 = vst [vmem:[%s187] sm:$0xff] %v186
  %s189 = scalar_lea.vmem %s0, 800
  %v190 = vld [vmem:[%s189] sm:$0xff]
  %s191 = scalar_lea.vmem %s1, 864
  %192 = vst [vmem:[%s191] sm:$0xff] %v190
  %v193 = vld [vmem:[%s0] sm:$0xff]
  %s194 = scalar_lea.vmem %s1, 96
  %195 = vst [vmem:[%s194] sm:$0xff] %v193
  %s196 = scalar_lea.vmem %s0, 448
  %v197 = vld [vmem:[%s196] sm:$0xff]
  %s198 = scalar_lea.vmem %s1, 544
  %199 = vst [vmem:[%s198] sm:$0xff] %v197
  %s200 = scalar_lea.vmem %s0, 112
  %v201 = vld [vmem:[%s200] sm:$0xff]
  %s202 = scalar_lea.vmem %s1, 208
  %203 = vst [vmem:[%s202] sm:$0xff] %v201
  %s204 = scalar_lea.vmem %s0, 560
  %v205 = vld [vmem:[%s204] sm:$0xff]
  %s206 = scalar_lea.vmem %s1, 656
  %207 = vst [vmem:[%s206] sm:$0xff] %v205
  %s208 = scalar_lea.vmem %s0, 224
  %v209 = vld [vmem:[%s208] sm:$0xff]
  %s210 = scalar_lea.vmem %s1, 320
  %211 = vst [vmem:[%s210] sm:$0xff] %v209
  %s212 = scalar_lea.vmem %s0, 672
  %v213 = vld [vmem:[%s212] sm:$0xff]
  %s214 = scalar_lea.vmem %s1, 768
  %215 = vst [vmem:[%s214] sm:$0xff] %v213
  %s216 = scalar_lea.vmem %s0, 336
  %v217 = vld [vmem:[%s216] sm:$0xff]
  %s218 = scalar_lea.vmem %s1, 432
  %219 = vst [vmem:[%s218] sm:$0xff] %v217
  %s220 = scalar_lea.vmem %s0, 784
  %v221 = vld [vmem:[%s220] sm:$0xff]
  %s222 = scalar_lea.vmem %s1, 880
  %223 = vst [vmem:[%s222] sm:$0xff] %v221
  %s224 = scalar_lea.vmem %s0, 104
  %v225 = vld [vmem:[%s224] sm:$0xff]
  %s226 = scalar_lea.vmem %s1, 8
  %227 = vst [vmem:[%s226] sm:$0xff] %v225
  %s228 = scalar_lea.vmem %s0, 552
  %v229 = vld [vmem:[%s228] sm:$0xff]
  %s230 = scalar_lea.vmem %s1, 456
  %231 = vst [vmem:[%s230] sm:$0xff] %v229
  %s232 = scalar_lea.vmem %s0, 216
  %v233 = vld [vmem:[%s232] sm:$0xff]
  %s234 = scalar_lea.vmem %s1, 120
  %235 = vst [vmem:[%s234] sm:$0xff] %v233
  %s236 = scalar_lea.vmem %s0, 664
  %v237 = vld [vmem:[%s236] sm:$0xff]
  %s238 = scalar_lea.vmem %s1, 568
  %239 = vst [vmem:[%s238] sm:$0xff] %v237
  %s240 = scalar_lea.vmem %s0, 328
  %v241 = vld [vmem:[%s240] sm:$0xff]
  %s242 = scalar_lea.vmem %s1, 232
  %243 = vst [vmem:[%s242] sm:$0xff] %v241
  %s244 = scalar_lea.vmem %s0, 776
  %v245 = vld [vmem:[%s244] sm:$0xff]
  %s246 = scalar_lea.vmem %s1, 680
  %247 = vst [vmem:[%s246] sm:$0xff] %v245
  %s248 = scalar_lea.vmem %s0, 440
  %v249 = vld [vmem:[%s248] sm:$0xff]
  %s250 = scalar_lea.vmem %s1, 344
  %251 = vst [vmem:[%s250] sm:$0xff] %v249
  %s252 = scalar_lea.vmem %s0, 888
  %v253 = vld [vmem:[%s252] sm:$0xff]
  %s254 = scalar_lea.vmem %s1, 792
  %255 = vst [vmem:[%s254] sm:$0xff] %v253
  %s256 = scalar_lea.vmem %s0, 88
  %v257 = vld [vmem:[%s256] sm:$0xff]
  %s258 = scalar_lea.vmem %s1, 24
  %259 = vst [vmem:[%s258] sm:$0xff] %v257
  %s260 = scalar_lea.vmem %s0, 536
  %v261 = vld [vmem:[%s260] sm:$0xff]
  %s262 = scalar_lea.vmem %s1, 472
  %263 = vst [vmem:[%s262] sm:$0xff] %v261
  %s264 = scalar_lea.vmem %s0, 200
  %v265 = vld [vmem:[%s264] sm:$0xff]
  %s266 = scalar_lea.vmem %s1, 136
  %267 = vst [vmem:[%s266] sm:$0xff] %v265
  %s268 = scalar_lea.vmem %s0, 648
  %v269 = vld [vmem:[%s268] sm:$0xff]
  %s270 = scalar_lea.vmem %s1, 584
  %271 = vst [vmem:[%s270] sm:$0xff] %v269
  %s272 = scalar_lea.vmem %s0, 312
  %v273 = vld [vmem:[%s272] sm:$0xff]
  %s274 = scalar_lea.vmem %s1, 248
  %275 = vst [vmem:[%s274] sm:$0xff] %v273
  %s276 = scalar_lea.vmem %s0, 760
  %v277 = vld [vmem:[%s276] sm:$0xff]
  %s278 = scalar_lea.vmem %s1, 696
  %279 = vst [vmem:[%s278] sm:$0xff] %v277
  %s280 = scalar_lea.vmem %s0, 424
  %v281 = vld [vmem:[%s280] sm:$0xff]
  %s282 = scalar_lea.vmem %s1, 360
  %283 = vst [vmem:[%s282] sm:$0xff] %v281
  %s284 = scalar_lea.vmem %s0, 872
  %v285 = vld [vmem:[%s284] sm:$0xff]
  %s286 = scalar_lea.vmem %s1, 808
  %287 = vst [vmem:[%s286] sm:$0xff] %v285
  %s288 = scalar_lea.vmem %s0, 72
  %v289 = vld [vmem:[%s288] sm:$0xff]
  %s290 = scalar_lea.vmem %s1, 40
  %291 = vst [vmem:[%s290] sm:$0xff] %v289
  %s292 = scalar_lea.vmem %s0, 520
  %v293 = vld [vmem:[%s292] sm:$0xff]
  %s294 = scalar_lea.vmem %s1, 488
  %295 = vst [vmem:[%s294] sm:$0xff] %v293
  %s296 = scalar_lea.vmem %s0, 184
  %v297 = vld [vmem:[%s296] sm:$0xff]
  %s298 = scalar_lea.vmem %s1, 152
  %299 = vst [vmem:[%s298] sm:$0xff] %v297
  %s300 = scalar_lea.vmem %s0, 632
  %v301 = vld [vmem:[%s300] sm:$0xff]
  %s302 = scalar_lea.vmem %s1, 600
  %303 = vst [vmem:[%s302] sm:$0xff] %v301
  %s304 = scalar_lea.vmem %s0, 296
  %v305 = vld [vmem:[%s304] sm:$0xff]
  %s306 = scalar_lea.vmem %s1, 264
  %307 = vst [vmem:[%s306] sm:$0xff] %v305
  %s308 = scalar_lea.vmem %s0, 744
  %v309 = vld [vmem:[%s308] sm:$0xff]
  %s310 = scalar_lea.vmem %s1, 712
  %311 = vst [vmem:[%s310] sm:$0xff] %v309
  %s312 = scalar_lea.vmem %s0, 408
  %v313 = vld [vmem:[%s312] sm:$0xff]
  %s314 = scalar_lea.vmem %s1, 376
  %315 = vst [vmem:[%s314] sm:$0xff] %v313
  %s316 = scalar_lea.vmem %s0, 856
  %v317 = vld [vmem:[%s316] sm:$0xff]
  %s318 = scalar_lea.vmem %s1, 824
  %319 = vst [vmem:[%s318] sm:$0xff] %v317
  %s320 = scalar_lea.vmem %s0, 56
  %v321 = vld [vmem:[%s320] sm:$0xff]
  %s322 = scalar_lea.vmem %s1, 56
  %323 = vst [vmem:[%s322] sm:$0xff] %v321
  %s324 = scalar_lea.vmem %s0, 504
  %v325 = vld [vmem:[%s324] sm:$0xff]
  %s326 = scalar_lea.vmem %s1, 504
  %327 = vst [vmem:[%s326] sm:$0xff] %v325
  %s328 = scalar_lea.vmem %s0, 168
  %v329 = vld [vmem:[%s328] sm:$0xff]
  %s330 = scalar_lea.vmem %s1, 168
  %331 = vst [vmem:[%s330] sm:$0xff] %v329
  %s332 = scalar_lea.vmem %s0, 616
  %v333 = vld [vmem:[%s332] sm:$0xff]
  %s334 = scalar_lea.vmem %s1, 616
  %335 = vst [vmem:[%s334] sm:$0xff] %v333
  %s336 = scalar_lea.vmem %s0, 280
  %v337 = vld [vmem:[%s336] sm:$0xff]
  %s338 = scalar_lea.vmem %s1, 280
  %339 = vst [vmem:[%s338] sm:$0xff] %v337
  %s340 = scalar_lea.vmem %s0, 728
  %v341 = vld [vmem:[%s340] sm:$0xff]
  %s342 = scalar_lea.vmem %s1, 728
  %343 = vst [vmem:[%s342] sm:$0xff] %v341
  %s344 = scalar_lea.vmem %s0, 392
  %v345 = vld [vmem:[%s344] sm:$0xff]
  %s346 = scalar_lea.vmem %s1, 392
  %347 = vst [vmem:[%s346] sm:$0xff] %v345
  %s348 = scalar_lea.vmem %s0, 840
  %v349 = vld [vmem:[%s348] sm:$0xff]
  %s350 = scalar_lea.vmem %s1, 840
  %351 = vst [vmem:[%s350] sm:$0xff] %v349
  %s352 = scalar_lea.vmem %s0, 40
  %v353 = vld [vmem:[%s352] sm:$0xff]
  %s354 = scalar_lea.vmem %s1, 72
  %355 = vst [vmem:[%s354] sm:$0xff] %v353
  %s356 = scalar_lea.vmem %s0, 488
  %v357 = vld [vmem:[%s356] sm:$0xff]
  %s358 = scalar_lea.vmem %s1, 520
  %359 = vst [vmem:[%s358] sm:$0xff] %v357
  %s360 = scalar_lea.vmem %s0, 152
  %v361 = vld [vmem:[%s360] sm:$0xff]
  %s362 = scalar_lea.vmem %s1, 184
  %363 = vst [vmem:[%s362] sm:$0xff] %v361
  %s364 = scalar_lea.vmem %s0, 600
  %v365 = vld [vmem:[%s364] sm:$0xff]
  %s366 = scalar_lea.vmem %s1, 632
  %367 = vst [vmem:[%s366] sm:$0xff] %v365
  %s368 = scalar_lea.vmem %s0, 264
  %v369 = vld [vmem:[%s368] sm:$0xff]
  %s370 = scalar_lea.vmem %s1, 296
  %371 = vst [vmem:[%s370] sm:$0xff] %v369
  %s372 = scalar_lea.vmem %s0, 712
  %v373 = vld [vmem:[%s372] sm:$0xff]
  %s374 = scalar_lea.vmem %s1, 744
  %375 = vst [vmem:[%s374] sm:$0xff] %v373
  %s376 = scalar_lea.vmem %s0, 376
  %v377 = vld [vmem:[%s376] sm:$0xff]
  %s378 = scalar_lea.vmem %s1, 408
  %379 = vst [vmem:[%s378] sm:$0xff] %v377
  %s380 = scalar_lea.vmem %s0, 824
  %v381 = vld [vmem:[%s380] sm:$0xff]
  %s382 = scalar_lea.vmem %s1, 856
  %383 = vst [vmem:[%s382] sm:$0xff] %v381
  %s384 = scalar_lea.vmem %s0, 24
  %v385 = vld [vmem:[%s384] sm:$0xff]
  %s386 = scalar_lea.vmem %s1, 88
  %387 = vst [vmem:[%s386] sm:$0xff] %v385
  %s388 = scalar_lea.vmem %s0, 472
  %v389 = vld [vmem:[%s388] sm:$0xff]
  %s390 = scalar_lea.vmem %s1, 536
  %391 = vst [vmem:[%s390] sm:$0xff] %v389
  %s392 = scalar_lea.vmem %s0, 136
  %v393 = vld [vmem:[%s392] sm:$0xff]
  %s394 = scalar_lea.vmem %s1, 200
  %395 = vst [vmem:[%s394] sm:$0xff] %v393
  %s396 = scalar_lea.vmem %s0, 584
  %v397 = vld [vmem:[%s396] sm:$0xff]
  %s398 = scalar_lea.vmem %s1, 648
  %399 = vst [vmem:[%s398] sm:$0xff] %v397
  %s400 = scalar_lea.vmem %s0, 248
  %v401 = vld [vmem:[%s400] sm:$0xff]
  %s402 = scalar_lea.vmem %s1, 312
  %403 = vst [vmem:[%s402] sm:$0xff] %v401
  %s404 = scalar_lea.vmem %s0, 696
  %v405 = vld [vmem:[%s404] sm:$0xff]
  %s406 = scalar_lea.vmem %s1, 760
  %407 = vst [vmem:[%s406] sm:$0xff] %v405
  %s408 = scalar_lea.vmem %s0, 360
  %v409 = vld [vmem:[%s408] sm:$0xff]
  %s410 = scalar_lea.vmem %s1, 424
  %411 = vst [vmem:[%s410] sm:$0xff] %v409
  %s412 = scalar_lea.vmem %s0, 808
  %v413 = vld [vmem:[%s412] sm:$0xff]
  %s414 = scalar_lea.vmem %s1, 872
  %415 = vst [vmem:[%s414] sm:$0xff] %v413
  %s416 = scalar_lea.vmem %s0, 8
  %v417 = vld [vmem:[%s416] sm:$0xff]
  %s418 = scalar_lea.vmem %s1, 104
  %419 = vst [vmem:[%s418] sm:$0xff] %v417
  %s420 = scalar_lea.vmem %s0, 456
  %v421 = vld [vmem:[%s420] sm:$0xff]
  %s422 = scalar_lea.vmem %s1, 552
  %423 = vst [vmem:[%s422] sm:$0xff] %v421
  %s424 = scalar_lea.vmem %s0, 120
  %v425 = vld [vmem:[%s424] sm:$0xff]
  %s426 = scalar_lea.vmem %s1, 216
  %427 = vst [vmem:[%s426] sm:$0xff] %v425
  %s428 = scalar_lea.vmem %s0, 568
  %v429 = vld [vmem:[%s428] sm:$0xff]
  %s430 = scalar_lea.vmem %s1, 664
  %431 = vst [vmem:[%s430] sm:$0xff] %v429
  %s432 = scalar_lea.vmem %s0, 232
  %v433 = vld [vmem:[%s432] sm:$0xff]
  %s434 = scalar_lea.vmem %s1, 328
  %435 = vst [vmem:[%s434] sm:$0xff] %v433
  %s436 = scalar_lea.vmem %s0, 680
  %v437 = vld [vmem:[%s436] sm:$0xff]
  %s438 = scalar_lea.vmem %s1, 776
  %439 = vst [vmem:[%s438] sm:$0xff] %v437
  %s440 = scalar_lea.vmem %s0, 344
  %v441 = vld [vmem:[%s440] sm:$0xff]
  %s442 = scalar_lea.vmem %s1, 440
  %443 = vst [vmem:[%s442] sm:$0xff] %v441
  %s444 = scalar_lea.vmem %s0, 792
  %v445 = vld [vmem:[%s444] sm:$0xff]
  %s446 = scalar_lea.vmem %s1, 888
  %447 = vst [vmem:[%s446] sm:$0xff] %v445

</llo_original>
